<compile_context>
chip_gen: v7x
topology: tpu7x:2x2x1
jax: 0.10.0
libtpu: 0.0.40
codegen_flags: <defaults>
</compile_context>

<pallas_src>
import jax
import jax.numpy as jnp
from jax.experimental import pallas as pl
from jax.experimental.pallas import tpu as pltpu

BN_EPS = 1e-5


# --------------------------------------------------------------------------
# In-kernel helpers
# --------------------------------------------------------------------------
def _zero_halo(pad_ref):
    """Zero only the 1-pixel halo of the (1, H+2, W+2, C) VMEM scratch."""
    _, Hp, Wp, C = pad_ref.shape
    pad_ref[:, 0:1, :, :] = jnp.zeros((1, 1, Wp, C), jnp.float32)
    pad_ref[:, Hp - 1:Hp, :, :] = jnp.zeros((1, 1, Wp, C), jnp.float32)
    pad_ref[:, :, 0:1, :] = jnp.zeros((1, Hp, 1, C), jnp.float32)
    pad_ref[:, :, Wp - 1:Wp, :] = jnp.zeros((1, Hp, 1, C), jnp.float32)


def _conv3x3_im2col(h, w_ref, pad_ref, patch_ref):
    """3x3 / stride-1 / pad-1 conv of one image as a single im2col matmul.

    h:         (1, H, W, Cin) f32 value
    w_ref:     (9*Cin, Cout)  VMEM ref (HWIO weights flattened over ky,kx,cin)
    pad_ref:   (1, H+2, W+2, Cin) VMEM scratch (halo-zeroed, interior written)
    patch_ref: (H*W, 9*Cin)   VMEM scratch (im2col patch matrix)
    returns    (H*W, Cout) f32
    """
    _, Hp, Wp, Cin = pad_ref.shape
    H, W = Hp - 2, Wp - 2
    _zero_halo(pad_ref)
    pad_ref[:, 1:H + 1, 1:W + 1, :] = h
    # Pack the 9 shifted taps along the contraction axis -> one MXU push.
    for dy in range(3):
        for dx in range(3):
            t = (dy * 3 + dx) * Cin
            patch_ref[:, t:t + Cin] = (
                pad_ref[:, dy:dy + H, dx:dx + W, :].reshape(H * W, Cin))
    return jnp.dot(patch_ref[...], w_ref[...],
                   preferred_element_type=jnp.float32)


def _store_stats(stats_ref, acc):
    """Per-image partial BN stats: sum and sum-of-squares (single pass)."""
    cout = acc.shape[-1]
    stats_ref[:, 0:1, :] = jnp.sum(acc, axis=0, keepdims=True).reshape(1, 1, cout)
    stats_ref[:, 1:2, :] = jnp.sum(acc * acc, axis=0,
                                   keepdims=True).reshape(1, 1, cout)


# --------------------------------------------------------------------------
# Kernels
# --------------------------------------------------------------------------
def _conv_stats_kernel(x_ref, w_ref, y_ref, stats_ref, pad_ref, patch_ref):
    """conv1: y = conv3x3(x); emit per-image (sum, sumsq) partials for bn1."""
    _, H, W, Cout = y_ref.shape
    acc = _conv3x3_im2col(x_ref[...], w_ref, pad_ref, patch_ref)
    y_ref[...] = acc.reshape(1, H, W, Cout)
    _store_stats(stats_ref, acc)


def _bn_relu_conv_stats_kernel(y1_ref, scale_ref, shift_ref, w_ref,
                               y2_ref, stats_ref, pad_ref, patch_ref):
    """h = relu(bn1(y1)) (bn folded to scale/shift); y2 = conv3x3(h); bn2 stats."""
    _, H, W, Cout = y2_ref.shape
    h = jnp.maximum(y1_ref[...] * scale_ref[...] + shift_ref[...], 0.0)
    acc = _conv3x3_im2col(h, w_ref, pad_ref, patch_ref)
    y2_ref[...] = acc.reshape(1, H, W, Cout)
    _store_stats(stats_ref, acc)


def _bn_residual_kernel(y2_ref, scale_ref, shift_ref, x_ref, out_ref):
    """out = bn2(y2) + x   (downsample is None, stride == 1, Cin == Cout)."""
    out_ref[...] = y2_ref[...] * scale_ref[...] + shift_ref[...] + x_ref[...]


# --------------------------------------------------------------------------
# pallas_call wrappers
# --------------------------------------------------------------------------
def _compiler_params():
    # 32 MiB scoped VMEM is safe on v5e/v6e/v7x; raise toward ~100 MiB on
    # v5e/v6e (128 MiB parts) when using larger per-step tiles.
    return pltpu.CompilerParams(dimension_semantics=("parallel",),
                                vmem_limit_bytes=32 * 1024 * 1024)


def _conv3x3_stats(x, wr):
    N, H, W, Cin = x.shape
    Cout = wr.shape[-1]
    flops = 2 * N * H * W * 9 * Cin * Cout
    bytes_accessed = 4 * (N * H * W * (Cin + Cout) + 9 * Cin * Cout
                          + N * 2 * Cout)
    return pl.pallas_call(
        _conv_stats_kernel,
        grid=(N,),
        in_specs=[
            pl.BlockSpec((1, H, W, Cin), lambda n: (n, 0, 0, 0)),
            pl.BlockSpec((9 * Cin, Cout), lambda n: (0, 0)),
        ],
        out_specs=(
            pl.BlockSpec((1, H, W, Cout), lambda n: (n, 0, 0, 0)),
            pl.BlockSpec((1, 2, Cout), lambda n: (n, 0, 0)),
        ),
        out_shape=(
            jax.ShapeDtypeStruct((N, H, W, Cout), jnp.float32),
            jax.ShapeDtypeStruct((N, 2, Cout), jnp.float32),
        ),
        scratch_shapes=[
            pltpu.VMEM((1, H + 2, W + 2, Cin), jnp.float32),
            pltpu.VMEM((H * W, 9 * Cin), jnp.float32),
        ],
        compiler_params=_compiler_params(),
        cost_estimate=pl.CostEstimate(flops=flops, transcendentals=0,
                                      bytes_accessed=bytes_accessed),
    )(x, wr)


def _bn_relu_conv3x3_stats(y1, scale, shift, wr):
    N, H, W, C = y1.shape
    Cout = wr.shape[-1]
    flops = 2 * N * H * W * 9 * C * Cout + 3 * N * H * W * C
    bytes_accessed = 4 * (N * H * W * (C + Cout) + 9 * C * Cout
                          + N * 2 * Cout + 2 * C)
    return pl.pallas_call(
        _bn_relu_conv_stats_kernel,
        grid=(N,),
        in_specs=[
            pl.BlockSpec((1, H, W, C), lambda n: (n, 0, 0, 0)),
            pl.BlockSpec((1, C), lambda n: (0, 0)),
            pl.BlockSpec((1, C), lambda n: (0, 0)),
            pl.BlockSpec((9 * C, Cout), lambda n: (0, 0)),
        ],
        out_specs=(
            pl.BlockSpec((1, H, W, Cout), lambda n: (n, 0, 0, 0)),
            pl.BlockSpec((1, 2, Cout), lambda n: (n, 0, 0)),
        ),
        out_shape=(
            jax.ShapeDtypeStruct((N, H, W, Cout), jnp.float32),
            jax.ShapeDtypeStruct((N, 2, Cout), jnp.float32),
        ),
        scratch_shapes=[
            pltpu.VMEM((1, H + 2, W + 2, C), jnp.float32),
            pltpu.VMEM((H * W, 9 * C), jnp.float32),
        ],
        compiler_params=_compiler_params(),
        cost_estimate=pl.CostEstimate(flops=flops, transcendentals=0,
                                      bytes_accessed=bytes_accessed),
    )(y1, scale, shift, wr)


def _bn_residual(y2, scale, shift, x):
    N, H, W, C = y2.shape
    flops = 3 * N * H * W * C
    bytes_accessed = 4 * (3 * N * H * W * C + 2 * C)
    return pl.pallas_call(
        _bn_residual_kernel,
        grid=(N,),
        in_specs=[
            pl.BlockSpec((1, H, W, C), lambda n: (n, 0, 0, 0)),
            pl.BlockSpec((1, C), lambda n: (0, 0)),
            pl.BlockSpec((1, C), lambda n: (0, 0)),
            pl.BlockSpec((1, H, W, C), lambda n: (n, 0, 0, 0)),
        ],
        out_specs=pl.BlockSpec((1, H, W, C), lambda n: (n, 0, 0, 0)),
        out_shape=jax.ShapeDtypeStruct((N, H, W, C), jnp.float32),
        compiler_params=_compiler_params(),
        cost_estimate=pl.CostEstimate(flops=flops, transcendentals=0,
                                      bytes_accessed=bytes_accessed),
    )(y2, scale, shift, x)


def _bn_fold(stats, gamma, beta, count):
    """Reduce per-image (sum, sumsq) partials; fold training-mode BN into
    per-channel scale/shift (O(C) glue between kernel phases)."""
    s = jnp.sum(stats, axis=0)                       # (2, C)
    mean = s[0] / count
    var = s[1] / count - mean * mean                 # biased variance
    invstd = jax.lax.rsqrt(var + BN_EPS)
    scale = gamma.astype(jnp.float32) * invstd
    shift = beta.astype(jnp.float32) - mean * scale
    return scale.reshape(1, -1), shift.reshape(1, -1)


def basic_block(x_nhwc, w1, gamma1, beta1, w2, gamma2, beta2):
    """x_nhwc: (N,H,W,C) f32; w1/w2: (3,3,C,C) f32 HWIO; gamma/beta: (C,) f32."""
    N, H, W, C = x_nhwc.shape
    Cout = w1.shape[-1]
    if Cout != C:
        # TODO(synk): stride>1 / downsample branch not implemented.
        raise NotImplementedError("kernel covers stride=1, downsample=None")
    x = x_nhwc.astype(jnp.float32)
    w1r = w1.astype(jnp.float32).reshape(9 * C, Cout)
    w2r = w2.astype(jnp.float32).reshape(9 * Cout, Cout)
    count = N * H * W

    y1, s1 = _conv3x3_stats(x, w1r)                       # conv1 + bn1 partials
    scale1, shift1 = _bn_fold(s1, gamma1, beta1, count)
    y2, s2 = _bn_relu_conv3x3_stats(y1, scale1, shift1, w2r)  # bn1+relu+conv2
    scale2, shift2 = _bn_fold(s2, gamma2, beta2, count)
    return _bn_residual(y2, scale2, shift2, x)            # bn2 + residual


# --------------------------------------------------------------------------
# Pure-JAX reference (training-mode BatchNorm, matching PyTorch .train())
# --------------------------------------------------------------------------
def basic_block_ref(x_nhwc, w1, gamma1, beta1, w2, gamma2, beta2):
    dn = ('NHWC', 'HWIO', 'NHWC')

    def bn(y, g, b):
        mean = y.mean(axis=(0, 1, 2))
        var = ((y - mean) ** 2).mean(axis=(0, 1, 2))
        return (y - mean) / jnp.sqrt(var + BN_EPS) * g + b

    y = jax.lax.conv_general_dilated(x_nhwc, w1, (1, 1), ((1, 1), (1, 1)),
                                     dimension_numbers=dn)
    y = jnp.maximum(bn(y, gamma1, beta1), 0.0)
    y = jax.lax.conv_general_dilated(y, w2, (1, 1), ((1, 1), (1, 1)),
                                     dimension_numbers=dn)
    y = bn(y, gamma2, beta2)
    return y + x_nhwc


if __name__ == "__main__":
    # Small shapes consistent with BasicBlock(in_channels=4, out_channels=4);
    # NHWC (2,16,16,4) == PyTorch NCHW (2,4,16,16).
    N, H, W, C = 2, 16, 16, 4

    key = jax.random.PRNGKey(0)
    kx, kw1, kw2 = jax.random.split(key, 3)

    x = jax.random.normal(kx, (N, H, W, C), dtype=jnp.float32)
    w1 = 0.1 * jax.random.normal(kw1, (3, 3, C, C), dtype=jnp.float32)
    w2 = 0.1 * jax.random.normal(kw2, (3, 3, C, C), dtype=jnp.float32)

    # BatchNorm2d default init: weight=1, bias=0
    gamma1 = jnp.ones((C,), jnp.float32)
    beta1 = jnp.zeros((C,), jnp.float32)
    gamma2 = jnp.ones((C,), jnp.float32)
    beta2 = jnp.zeros((C,), jnp.float32)

    out = basic_block(x, w1, gamma1, beta1, w2, gamma2, beta2)
    out = jax.block_until_ready(out)

    ref = basic_block_ref(x, w1, gamma1, beta1, w2, gamma2, beta2)
    assert out.shape == (N, H, W, C)
    assert jnp.allclose(out, ref, atol=1e-4, rtol=1e-4), (
        f"max abs err = {jnp.max(jnp.abs(out - ref))}")

    print("KERNEL_OK")
</pallas_src>

<mosaic_0001>
module attributes {stable_mosaic.version = 11 : i64} {
  func.func @_conv_stats_kernel(%arg0: i32, %arg1: memref<1x16x16x4xf32, #tpu.memory_space<vmem>>, %arg2: memref<36x4xf32, #tpu.memory_space<vmem>>, %arg3: memref<1x16x16x4xf32, #tpu.memory_space<vmem>>, %arg4: memref<1x2x4xf32, #tpu.memory_space<vmem>>, %arg5: memref<1x18x18x4xf32, #tpu.memory_space<vmem>>, %arg6: memref<256x36xf32, #tpu.memory_space<vmem>>) attributes {dimension_semantics = [#tpu.dimension_semantics<parallel>], iteration_bounds = array<i64: 2>, scalar_prefetch = 0 : i64, scratch_operands = 2 : i64, tpu.core_type = #tpu.core_type<tc>, window_params = [{transform_indices = @transform_0, window_bounds = array<i64: 1, 16, 16, 4>}, {pipeline_mode = #tpu.pipeline_mode<synchronous>, transform_indices = @transform_1, window_bounds = array<i64: 36, 4>}, {transform_indices = @transform_2, window_bounds = array<i64: 1, 16, 16, 4>}, {transform_indices = @transform_3, window_bounds = array<i64: 1, 2, 4>}]} {
    %c0 = arith.constant 0 : index
    %c0_0 = arith.constant 0 : index
    %c0_1 = arith.constant 0 : index
    %c0_2 = arith.constant 0 : index
    %0 = vector.load %arg1[%c0, %c0_0, %c0_1, %c0_2] : memref<1x16x16x4xf32, #tpu.memory_space<vmem>>, vector<1x16x16x4xf32>
    %cst = arith.constant 0.000000e+00 : f32
    %1 = vector.broadcast %cst : f32 to vector<1x1x18x4xf32>
    %c0_3 = arith.constant 0 : index
    %c0_4 = arith.constant 0 : index
    %c0_5 = arith.constant 0 : index
    %c0_6 = arith.constant 0 : index
    %2 = vector.load %arg5[%c0_3, %c0_4, %c0_5, %c0_6] : memref<1x18x18x4xf32, #tpu.memory_space<vmem>>, vector<1x1x18x4xf32>
    tpu.vector_store %arg5[%c0_3, %c0_4, %c0_5, %c0_6], %1 {strides = array<i32>} : memref<1x18x18x4xf32, #tpu.memory_space<vmem>>, vector<1x1x18x4xf32>,
    %cst_7 = arith.constant 0.000000e+00 : f32
    %3 = vector.broadcast %cst_7 : f32 to vector<1x1x18x4xf32>
    %c0_8 = arith.constant 0 : index
    %c17 = arith.constant 17 : index
    %c0_9 = arith.constant 0 : index
    %c0_10 = arith.constant 0 : index
    %4 = vector.load %arg5[%c0_8, %c17, %c0_9, %c0_10] : memref<1x18x18x4xf32, #tpu.memory_space<vmem>>, vector<1x1x18x4xf32>
    tpu.vector_store %arg5[%c0_8, %c17, %c0_9, %c0_10], %3 {strides = array<i32>} : memref<1x18x18x4xf32, #tpu.memory_space<vmem>>, vector<1x1x18x4xf32>,
    %cst_11 = arith.constant 0.000000e+00 : f32
    %5 = vector.broadcast %cst_11 : f32 to vector<1x18x1x4xf32>
    %c0_12 = arith.constant 0 : index
    %c0_13 = arith.constant 0 : index
    %c0_14 = arith.constant 0 : index
    %c0_15 = arith.constant 0 : index
    %6 = vector.load %arg5[%c0_12, %c0_13, %c0_14, %c0_15] : memref<1x18x18x4xf32, #tpu.memory_space<vmem>>, vector<1x18x1x4xf32>
    tpu.vector_store %arg5[%c0_12, %c0_13, %c0_14, %c0_15], %5 {strides = array<i32>} : memref<1x18x18x4xf32, #tpu.memory_space<vmem>>, vector<1x18x1x4xf32>,
    %cst_16 = arith.constant 0.000000e+00 : f32
    %7 = vector.broadcast %cst_16 : f32 to vector<1x18x1x4xf32>
    %c0_17 = arith.constant 0 : index
    %c0_18 = arith.constant 0 : index
    %c17_19 = arith.constant 17 : index
    %c0_20 = arith.constant 0 : index
    %8 = vector.load %arg5[%c0_17, %c0_18, %c17_19, %c0_20] : memref<1x18x18x4xf32, #tpu.memory_space<vmem>>, vector<1x18x1x4xf32>
    tpu.vector_store %arg5[%c0_17, %c0_18, %c17_19, %c0_20], %7 {strides = array<i32>} : memref<1x18x18x4xf32, #tpu.memory_space<vmem>>, vector<1x18x1x4xf32>,
    %c0_21 = arith.constant 0 : index
    %c1 = arith.constant 1 : index
    %c1_22 = arith.constant 1 : index
    %c0_23 = arith.constant 0 : index
    %9 = vector.load %arg5[%c0_21, %c1, %c1_22, %c0_23] : memref<1x18x18x4xf32, #tpu.memory_space<vmem>>, vector<1x16x16x4xf32>
    tpu.vector_store %arg5[%c0_21, %c1, %c1_22, %c0_23], %0 {strides = array<i32>} : memref<1x18x18x4xf32, #tpu.memory_space<vmem>>, vector<1x16x16x4xf32>,
    %c0_24 = arith.constant 0 : index
    %c0_25 = arith.constant 0 : index
    %c0_26 = arith.constant 0 : index
    %c0_27 = arith.constant 0 : index
    %10 = vector.load %arg5[%c0_24, %c0_25, %c0_26, %c0_27] : memref<1x18x18x4xf32, #tpu.memory_space<vmem>>, vector<1x16x16x4xf32>
    %11 = vector.shape_cast %10 : vector<1x16x16x4xf32> to vector<256x4xf32>
    %c0_28 = arith.constant 0 : index
    %c0_29 = arith.constant 0 : index
    %12 = vector.load %arg6[%c0_28, %c0_29] : memref<256x36xf32, #tpu.memory_space<vmem>>, vector<256x4xf32>
    tpu.vector_store %arg6[%c0_28, %c0_29], %11 {strides = array<i32>} : memref<256x36xf32, #tpu.memory_space<vmem>>, vector<256x4xf32>,
    %c0_30 = arith.constant 0 : index
    %c0_31 = arith.constant 0 : index
    %c1_32 = arith.constant 1 : index
    %c0_33 = arith.constant 0 : index
    %13 = vector.load %arg5[%c0_30, %c0_31, %c1_32, %c0_33] : memref<1x18x18x4xf32, #tpu.memory_space<vmem>>, vector<1x16x16x4xf32>
    %14 = vector.shape_cast %13 : vector<1x16x16x4xf32> to vector<256x4xf32>
    %c0_34 = arith.constant 0 : index
    %c4 = arith.constant 4 : index
    %15 = vector.load %arg6[%c0_34, %c4] : memref<256x36xf32, #tpu.memory_space<vmem>>, vector<256x4xf32>
    tpu.vector_store %arg6[%c0_34, %c4], %14 {strides = array<i32>} : memref<256x36xf32, #tpu.memory_space<vmem>>, vector<256x4xf32>,
    %c0_35 = arith.constant 0 : index
    %c0_36 = arith.constant 0 : index
    %c2 = arith.constant 2 : index
    %c0_37 = arith.constant 0 : index
    %16 = vector.load %arg5[%c0_35, %c0_36, %c2, %c0_37] : memref<1x18x18x4xf32, #tpu.memory_space<vmem>>, vector<1x16x16x4xf32>
    %17 = vector.shape_cast %16 : vector<1x16x16x4xf32> to vector<256x4xf32>
    %c0_38 = arith.constant 0 : index
    %c8 = arith.constant 8 : index
    %18 = vector.load %arg6[%c0_38, %c8] : memref<256x36xf32, #tpu.memory_space<vmem>>, vector<256x4xf32>
    tpu.vector_store %arg6[%c0_38, %c8], %17 {strides = array<i32>} : memref<256x36xf32, #tpu.memory_space<vmem>>, vector<256x4xf32>,
    %c0_39 = arith.constant 0 : index
    %c1_40 = arith.constant 1 : index
    %c0_41 = arith.constant 0 : index
    %c0_42 = arith.constant 0 : index
    %19 = vector.load %arg5[%c0_39, %c1_40, %c0_41, %c0_42] : memref<1x18x18x4xf32, #tpu.memory_space<vmem>>, vector<1x16x16x4xf32>
    %20 = vector.shape_cast %19 : vector<1x16x16x4xf32> to vector<256x4xf32>
    %c0_43 = arith.constant 0 : index
    %c12 = arith.constant 12 : index
    %21 = vector.load %arg6[%c0_43, %c12] : memref<256x36xf32, #tpu.memory_space<vmem>>, vector<256x4xf32>
    tpu.vector_store %arg6[%c0_43, %c12], %20 {strides = array<i32>} : memref<256x36xf32, #tpu.memory_space<vmem>>, vector<256x4xf32>,
    %c0_44 = arith.constant 0 : index
    %c1_45 = arith.constant 1 : index
    %c1_46 = arith.constant 1 : index
    %c0_47 = arith.constant 0 : index
    %22 = vector.load %arg5[%c0_44, %c1_45, %c1_46, %c0_47] : memref<1x18x18x4xf32, #tpu.memory_space<vmem>>, vector<1x16x16x4xf32>
    %23 = vector.shape_cast %22 : vector<1x16x16x4xf32> to vector<256x4xf32>
    %c0_48 = arith.constant 0 : index
    %c16 = arith.constant 16 : index
    %24 = vector.load %arg6[%c0_48, %c16] : memref<256x36xf32, #tpu.memory_space<vmem>>, vector<256x4xf32>
    tpu.vector_store %arg6[%c0_48, %c16], %23 {strides = array<i32>} : memref<256x36xf32, #tpu.memory_space<vmem>>, vector<256x4xf32>,
    %c0_49 = arith.constant 0 : index
    %c1_50 = arith.constant 1 : index
    %c2_51 = arith.constant 2 : index
    %c0_52 = arith.constant 0 : index
    %25 = vector.load %arg5[%c0_49, %c1_50, %c2_51, %c0_52] : memref<1x18x18x4xf32, #tpu.memory_space<vmem>>, vector<1x16x16x4xf32>
    %26 = vector.shape_cast %25 : vector<1x16x16x4xf32> to vector<256x4xf32>
    %c0_53 = arith.constant 0 : index
    %c20 = arith.constant 20 : index
    %27 = vector.load %arg6[%c0_53, %c20] : memref<256x36xf32, #tpu.memory_space<vmem>>, vector<256x4xf32>
    tpu.vector_store %arg6[%c0_53, %c20], %26 {strides = array<i32>} : memref<256x36xf32, #tpu.memory_space<vmem>>, vector<256x4xf32>,
    %c0_54 = arith.constant 0 : index
    %c2_55 = arith.constant 2 : index
    %c0_56 = arith.constant 0 : index
    %c0_57 = arith.constant 0 : index
    %28 = vector.load %arg5[%c0_54, %c2_55, %c0_56, %c0_57] : memref<1x18x18x4xf32, #tpu.memory_space<vmem>>, vector<1x16x16x4xf32>
    %29 = vector.shape_cast %28 : vector<1x16x16x4xf32> to vector<256x4xf32>
    %c0_58 = arith.constant 0 : index
    %c24 = arith.constant 24 : index
    %30 = vector.load %arg6[%c0_58, %c24] : memref<256x36xf32, #tpu.memory_space<vmem>>, vector<256x4xf32>
    tpu.vector_store %arg6[%c0_58, %c24], %29 {strides = array<i32>} : memref<256x36xf32, #tpu.memory_space<vmem>>, vector<256x4xf32>,
    %c0_59 = arith.constant 0 : index
    %c2_60 = arith.constant 2 : index
    %c1_61 = arith.constant 1 : index
    %c0_62 = arith.constant 0 : index
    %31 = vector.load %arg5[%c0_59, %c2_60, %c1_61, %c0_62] : memref<1x18x18x4xf32, #tpu.memory_space<vmem>>, vector<1x16x16x4xf32>
    %32 = vector.shape_cast %31 : vector<1x16x16x4xf32> to vector<256x4xf32>
    %c0_63 = arith.constant 0 : index
    %c28 = arith.constant 28 : index
    %33 = vector.load %arg6[%c0_63, %c28] : memref<256x36xf32, #tpu.memory_space<vmem>>, vector<256x4xf32>
    tpu.vector_store %arg6[%c0_63, %c28], %32 {strides = array<i32>} : memref<256x36xf32, #tpu.memory_space<vmem>>, vector<256x4xf32>,
    %c0_64 = arith.constant 0 : index
    %c2_65 = arith.constant 2 : index
    %c2_66 = arith.constant 2 : index
    %c0_67 = arith.constant 0 : index
    %34 = vector.load %arg5[%c0_64, %c2_65, %c2_66, %c0_67] : memref<1x18x18x4xf32, #tpu.memory_space<vmem>>, vector<1x16x16x4xf32>
    %35 = vector.shape_cast %34 : vector<1x16x16x4xf32> to vector<256x4xf32>
    %c0_68 = arith.constant 0 : index
    %c32 = arith.constant 32 : index
    %36 = vector.load %arg6[%c0_68, %c32] : memref<256x36xf32, #tpu.memory_space<vmem>>, vector<256x4xf32>
    tpu.vector_store %arg6[%c0_68, %c32], %35 {strides = array<i32>} : memref<256x36xf32, #tpu.memory_space<vmem>>, vector<256x4xf32>,
    %c0_69 = arith.constant 0 : index
    %c0_70 = arith.constant 0 : index
    %37 = vector.load %arg6[%c0_69, %c0_70] : memref<256x36xf32, #tpu.memory_space<vmem>>, vector<256x36xf32>
    %c0_71 = arith.constant 0 : index
    %c0_72 = arith.constant 0 : index
    %38 = vector.load %arg2[%c0_71, %c0_72] : memref<36x4xf32, #tpu.memory_space<vmem>>, vector<36x4xf32>
    %cst_73 = arith.constant dense<0.000000e+00> : vector<256x4xf32>
    %39 = tpu.matmul %37, %38, %cst_73 {dimension_numbers = #tpu.dot_dimension_numbers<[1], [0], [0], [1], [0, 0, 1, 1], [], []>} : vector<256x36xf32>, vector<36x4xf32>, vector<256x4xf32> -> vector<256x4xf32>
    %40 = vector.shape_cast %39 : vector<256x4xf32> to vector<1x16x16x4xf32>
    %c0_74 = arith.constant 0 : index
    %c0_75 = arith.constant 0 : index
    %c0_76 = arith.constant 0 : index
    %c0_77 = arith.constant 0 : index
    %41 = vector.load %arg3[%c0_74, %c0_75, %c0_76, %c0_77] : memref<1x16x16x4xf32, #tpu.memory_space<vmem>>, vector<1x16x16x4xf32>
    tpu.vector_store %arg3[%c0_74, %c0_75, %c0_76, %c0_77], %40 {strides = array<i32>} : memref<1x16x16x4xf32, #tpu.memory_space<vmem>>, vector<1x16x16x4xf32>,
    %cst_78 = arith.constant dense<0.000000e+00> : vector<4xf32>
    %42 = vector.multi_reduction <add>, %39, %cst_78 [0] : vector<256x4xf32> to vector<4xf32>
    %43 = vector.shape_cast %42 : vector<4xf32> to vector<1x4xf32>
    %44 = vector.shape_cast %43 : vector<1x4xf32> to vector<1x1x4xf32>
    %c0_79 = arith.constant 0 : index
    %c0_80 = arith.constant 0 : index
    %c0_81 = arith.constant 0 : index
    %45 = vector.load %arg4[%c0_79, %c0_80, %c0_81] : memref<1x2x4xf32, #tpu.memory_space<vmem>>, vector<1x1x4xf32>
    tpu.vector_store %arg4[%c0_79, %c0_80, %c0_81], %44 {strides = array<i32>} : memref<1x2x4xf32, #tpu.memory_space<vmem>>, vector<1x1x4xf32>,
    %46 = arith.mulf %39, %39 : vector<256x4xf32>
    %cst_82 = arith.constant dense<0.000000e+00> : vector<4xf32>
    %47 = vector.multi_reduction <add>, %46, %cst_82 [0] : vector<256x4xf32> to vector<4xf32>
    %48 = vector.shape_cast %47 : vector<4xf32> to vector<1x4xf32>
    %49 = vector.shape_cast %48 : vector<1x4xf32> to vector<1x1x4xf32>
    %c0_83 = arith.constant 0 : index
    %c1_84 = arith.constant 1 : index
    %c0_85 = arith.constant 0 : index
    %50 = vector.load %arg4[%c0_83, %c1_84, %c0_85] : memref<1x2x4xf32, #tpu.memory_space<vmem>>, vector<1x1x4xf32>
    tpu.vector_store %arg4[%c0_83, %c1_84, %c0_85], %49 {strides = array<i32>} : memref<1x2x4xf32, #tpu.memory_space<vmem>>, vector<1x1x4xf32>,
    return
  }
  func.func @transform_0(%arg0: i32) -> (i32, i32, i32, i32) {
    %c0_i32 = arith.constant 0 : i32
    %c0_i32_0 = arith.constant 0 : i32
    %c0_i32_1 = arith.constant 0 : i32
    %c0_i32_2 = arith.constant 0 : i32
    return %arg0, %c0_i32, %c0_i32_0, %c0_i32_1 : i32, i32, i32, i32
  }
  func.func @transform_1(%arg0: i32) -> (i32, i32) {
    %c0_i32 = arith.constant 0 : i32
    %c0_i32_0 = arith.constant 0 : i32
    %c0_i32_1 = arith.constant 0 : i32
    return %c0_i32, %c0_i32_0 : i32, i32
  }
  func.func @transform_2(%arg0: i32) -> (i32, i32, i32, i32) {
    %c0_i32 = arith.constant 0 : i32
    %c0_i32_0 = arith.constant 0 : i32
    %c0_i32_1 = arith.constant 0 : i32
    %c0_i32_2 = arith.constant 0 : i32
    return %arg0, %c0_i32, %c0_i32_0, %c0_i32_1 : i32, i32, i32, i32
  }
  func.func @transform_3(%arg0: i32) -> (i32, i32, i32) {
    %c0_i32 = arith.constant 0 : i32
    %c0_i32_0 = arith.constant 0 : i32
    %c0_i32_1 = arith.constant 0 : i32
    return %arg0, %c0_i32, %c0_i32_0 : i32, i32, i32
  }
}

</mosaic_0001>

<llo_original>
// kernel: tpu_custom_call.1
$region0: #{tpu_custom_call.1}
  #allocation0 [shape = 'u32[]', space=smem, size = 0x4, offset = 0x4, fixed_abs, tag = 'smem constant byte address 0x4 - core index']
  #allocation1 [shape = 'u32[144,128]{1,0:T(1,128)}', space=vmem, size = 0x12000, scoped, tag = 'internal scratch']
  #allocation2 [shape = 'f32[1,18,18,4]{3,2,1,0:T(8,128)}', space=vmem, size = 0x36000, scoped, tag = 'scratch operand']
  #allocation3 [shape = 'f32[256,36]{1,0:T(8,128)}', space=vmem, size = 0x20000, scoped, tag = 'scratch operand']
  %s0 = inlined_call_operand.vmem [shape: f32[2,16,16,4], index: 0, kind: input, shape index: {}]
  %s1 = inlined_call_operand.vmem [shape: f32[36,4], index: 1, kind: input, shape index: {}]
  %s2 = inlined_call_operand.vmem [shape: f32[2,16,16,4], index: 2, kind: output, shape index: {0}]
  %s3 = inlined_call_operand.hbm [shape: f32[2,2,4], index: 3, kind: output, shape index: {1}]
  %4 = xla_tuple %s2, %s3
  %s5 = sld [smem:[#allocation0]]
  $region49: #{tpu_custom_call.1} parent=0
    _
  %s7 = ssub.s32 1, %s5
  %s8 = scalar_select 0, %s7, %s5
  $region1: #{tpu_custom_call.1} parent=0
    #allocation4 [shape = 'u8[2048]{0}', space=vmem, size = 0x800, scoped, tag = 'output window, operand 1']
    #allocation5 [shape = 's32[2]{0}', space=sflag, size = 0x8, scoped, tag = 'scoped memory for tpu_custom_call.1']
    %9 = vsyncpa [#allocation5], 0
    %s10 = scalar_lea.sflag [#allocation5], 1
    %11 = vsyncpa %s10, 0
    loop: start=0, step=1, limit=4
    $region2: #{tpu_custom_call.1} parent=1 // loop_pre_header
      _
    $region3: #{tpu_custom_call.1} parent=1 // loop_header
      %s13 = sphi 0, %s17
      %p14 = scmp.ge.s32.totalorder %s13, 4
      %s23 = sphi 0, %s25
      %s26 = sphi 0, %s23
      %s27 = sphi 0, %s26
      %s43 = sphi 0, %s27
      %s47 = sphi 0, %s47
      %s49 = sphi 0, %s47
      %s50 = sphi 0, %s49
      %s64 = sphi 0, %s50
      %s70 = sphi 0, %s72
      %s73 = sphi 0, %s70
      %s74 = sphi 0, %s73
      %s90 = sphi 0, %s74
      %s96 = sphi 0, %s98
      %s99 = sphi 0, %s96
      %s100 = sphi 0, %s99
      %s116 = sphi 0, %s100
    $region4: #{tpu_custom_call.1} parent=1 // loop_header_branch
      %16 = sbr.rel (%p14) target = $region8
    $region5: #{tpu_custom_call.1} parent=1 // loop_body
      %s18 = ssub.s32 %s13, 1
      %s19 = ssub.s32 %s13, 2
      %s20 = sadd.s32 %s13, 1
      %s21 = ssub.s32 %s13, %s20
      %p22 = scmp.eq.s32.totalorder %s21, 0
      %s24 = sadd.s32 %s23, 1
      %s25 = scalar_select %p22, %s23, %s24
      %p28 = pneg %p22
      %p29 = scmp.eq.s32.totalorder %s13, 1
      %p30 = por %p28, %p29
      %p31 = scmp.ne.s32.totalorder %s23, %s26
      %p32 = scmp.eq.s32.totalorder %s13, 0
      %p33 = por %p31, %p32
      %p34 = scmp.ne.s32.totalorder %s23, %s26
      %p35 = scmp.eq.s32.totalorder %s18, 1
      %p36 = por %p34, %p35
      %p37 = scmp.ne.s32.totalorder %s26, %s27
      %p38 = scmp.eq.s32.totalorder %s18, 0
      %p39 = por %p37, %p38
      %p40 = scmp.ne.s32.totalorder %s26, %s27
      %p41 = scmp.eq.s32.totalorder %s19, 1
      %p42 = por %p40, %p41
      %p44 = scmp.ne.s32.totalorder %s27, %s43
      %p45 = scmp.eq.s32.totalorder %s19, 0
      %p46 = por %p44, %p45
      %s48 = sadd.s32 %s47, 1
      %p51 = scmp.eq.s32.totalorder %s13, 1
      %p52 = scmp.ne.s32.totalorder %s47, %s49
      %p53 = scmp.eq.s32.totalorder %s13, 0
      %p54 = por %p52, %p53
      %p55 = scmp.ne.s32.totalorder %s47, %s49
      %p56 = scmp.eq.s32.totalorder %s18, 1
      %p57 = por %p55, %p56
      %p58 = scmp.ne.s32.totalorder %s49, %s50
      %p59 = scmp.eq.s32.totalorder %s18, 0
      %p60 = por %p58, %p59
      %p61 = scmp.ne.s32.totalorder %s49, %s50
      %p62 = scmp.eq.s32.totalorder %s19, 1
      %p63 = por %p61, %p62
      %p65 = scmp.ne.s32.totalorder %s50, %s64
      %p66 = scmp.eq.s32.totalorder %s19, 0
      %p67 = por %p65, %p66
      %s68 = ssub.s32 %s13, %s20
      %p69 = scmp.eq.s32.totalorder %s68, 0
      %s71 = sadd.s32 %s70, 1
      %s72 = scalar_select %p69, %s70, %s71
      %p75 = pneg %p69
      %p76 = scmp.eq.s32.totalorder %s13, 1
      %p77 = por %p75, %p76
      %p78 = scmp.ne.s32.totalorder %s70, %s73
      %p79 = scmp.eq.s32.totalorder %s13, 0
      %p80 = por %p78, %p79
      %p81 = scmp.ne.s32.totalorder %s70, %s73
      %p82 = scmp.eq.s32.totalorder %s18, 1
      %p83 = por %p81, %p82
      %p84 = scmp.ne.s32.totalorder %s73, %s74
      %p85 = scmp.eq.s32.totalorder %s18, 0
      %p86 = por %p84, %p85
      %p87 = scmp.ne.s32.totalorder %s73, %s74
      %p88 = scmp.eq.s32.totalorder %s19, 1
      %p89 = por %p87, %p88
      %p91 = scmp.ne.s32.totalorder %s74, %s90
      %p92 = scmp.eq.s32.totalorder %s19, 0
      %p93 = por %p91, %p92
      %s94 = ssub.s32 %s13, %s20
      %p95 = scmp.eq.s32.totalorder %s94, 0
      %s97 = sadd.s32 %s96, 1
      %s98 = scalar_select %p95, %s96, %s97
      %p101 = pneg %p95
      %p102 = scmp.eq.s32.totalorder %s13, 1
      %p103 = por %p101, %p102
      %p104 = scmp.ne.s32.totalorder %s96, %s99
      %p105 = scmp.eq.s32.totalorder %s13, 0
      %p106 = por %p104, %p105
      %p107 = scmp.ne.s32.totalorder %s96, %s99
      %p108 = scmp.eq.s32.totalorder %s18, 1
      %p109 = por %p107, %p108
      %p110 = scmp.ne.s32.totalorder %s99, %s100
      %p111 = scmp.eq.s32.totalorder %s18, 0
      %p112 = por %p110, %p111
      %p113 = scmp.ne.s32.totalorder %s99, %s100
      %p114 = scmp.eq.s32.totalorder %s19, 1
      %p115 = por %p113, %p114
      %p117 = scmp.ne.s32.totalorder %s100, %s116
      %p118 = scmp.eq.s32.totalorder %s19, 0
      %p119 = por %p117, %p118
      %p120 = scmp.le.s32.totalorder 1, %s13
      %p121 = scmp.lt.s32.totalorder %s13, 3
      %p122 = pnand %p120, %p121
      %p123 = pneg %p122
      // Predicated region
      $region9: #{tpu_custom_call.1} parent=5 // pred_check
        _
      $region10: #{tpu_custom_call.1} parent=5 // pred_check_branch
        %125 = sbr.rel (%p122) target = $region12
      $region11: #{tpu_custom_call.1} parent=5 // pred_region
        %s126 = ssub.s32 %s13, 1
        // Predicated region
        $region13: #{tpu_custom_call.1} parent=11 // pred_check
          %p127 = pneg %p60
        $region14: #{tpu_custom_call.1} parent=11 // pred_check_branch
          %129 = sbr.rel (%p127) target = $region16
        $region15: #{tpu_custom_call.1} parent=11 // pred_region
          _
        $region16: #{tpu_custom_call.1} parent=11 // pred_fallthru
          _
      $region12: #{tpu_custom_call.1} parent=5 // pred_fallthru
        _
      %p130 = scmp.lt.s32.totalorder %s13, 2
      // Predicated region
      $region17: #{tpu_custom_call.1} parent=5 // pred_check
        %p131 = pneg %p130
      $region18: #{tpu_custom_call.1} parent=5 // pred_check_branch
        %133 = sbr.rel (%p131) target = $region20
      $region19: #{tpu_custom_call.1} parent=5 // pred_region
        // Predicated region
        $region21: #{tpu_custom_call.1} parent=19 // pred_check
          %p134 = pneg %p33
        $region22: #{tpu_custom_call.1} parent=19 // pred_check_branch
          %136 = sbr.rel (%p134) target = $region24
        $region23: #{tpu_custom_call.1} parent=19 // pred_region
          %p137 = scmp.lt.s32.totalorder %s13, 1
          %s138 = scalar_select %p137, %s13, 1
          %s139 = smul.addr %s138, 32
          %s140 = smul.addr %s139, 8
          %s141 = scalar_lea.vmem %s0, %s140
        $region24: #{tpu_custom_call.1} parent=19 // pred_fallthru
          _
      $region20: #{tpu_custom_call.1} parent=5 // pred_fallthru
        _
      %p142 = scmp.le.s32.totalorder 1, %s13
      %p143 = scmp.lt.s32.totalorder %s13, 3
      %p144 = pnand %p142, %p143
      %p145 = pneg %p144
      // Predicated region
      $region25: #{tpu_custom_call.1} parent=5 // pred_check
        _
      $region26: #{tpu_custom_call.1} parent=5 // pred_check_branch
        %147 = sbr.rel (%p144) target = $region28
      $region27: #{tpu_custom_call.1} parent=5 // pred_region
        %s148 = ssub.s32 %s13, 1
        %p149 = scmp.lt.s32.totalorder %s18, 1
        %s150 = scalar_select %p149, %s18, 1
        %s151 = smul.addr %s150, 32
        %s152 = smul.addr %s151, 8
        %s153 = scalar_lea.vmem %s0, %s152
        %p154 = pneg %p39
        %p155 = pneg %p36
        %p156 = pneg %p60
        %p157 = pneg %p57
        %p158 = pneg %p86
        %p159 = pneg %p83
        %p160 = scmp.lt.s32.totalorder %s18, 1
        %s161 = scalar_select %p160, %s18, 1
        %s162 = smul.addr %s161, 32
        %s163 = smul.addr %s162, 8
        %s164 = scalar_lea.vmem %s2, %s163
        %p165 = pneg %p112
        %p166 = pneg %p109
        %s167 = sand.u32 %s99, 1
        %s168 = scalar_lea.sflag [#allocation5], %s167
        %s169 = sand.u32 %s99, 1
        %s170 = smul.addr %s169, 2
        %s171 = scalar_lea.vmem [#allocation4], %s170
        %p172 = scmp.lt.s32.totalorder %s18, 1
        %s173 = scalar_select %p172, %s18, 1
        %s174 = smul.addr %s173, 32
        %s175 = smul.addr %s174, 8
        %s176 = scalar_lea.vmem %s0, %s175
        %p177 = scmp.lt.s32.totalorder %s18, 1
        %s178 = scalar_select %p177, %s18, 1
        %s179 = smul.addr %s178, 32
        %s180 = smul.addr %s179, 8
        %s181 = scalar_lea.vmem %s2, %s180
        %v182 = vld [vmem:[%s176] sm:$0xff]
        %v183 = vld [vmem:[%s176 + $0x8] sm:$0xff]
        %v184 = vld [vmem:[%s176 + $0x10] sm:$0xff]
        %v185 = vld [vmem:[%s176 + $0x18] sm:$0xff]
        %v186 = vld [vmem:[%s176 + $0x20] sm:$0xff]
        %v187 = vld [vmem:[%s176 + $0x28] sm:$0xff]
        %v188 = vld [vmem:[%s176 + $0x30] sm:$0xff]
        %v189 = vld [vmem:[%s176 + $0x38] sm:$0xff]
        %v190 = vld [vmem:[%s176 + $0x40] sm:$0xff]
        %v191 = vld [vmem:[%s176 + $0x48] sm:$0xff]
        %v192 = vld [vmem:[%s176 + $0x50] sm:$0xff]
        %v193 = vld [vmem:[%s176 + $0x58] sm:$0xff]
        %v194 = vld [vmem:[%s176 + $0x60] sm:$0xff]
        %v195 = vld [vmem:[%s176 + $0x68] sm:$0xff]
        %v196 = vld [vmem:[%s176 + $0x70] sm:$0xff]
        %v197 = vld [vmem:[%s176 + $0x78] sm:$0xff]
        %v198 = vld [vmem:[%s176 + $0x80] sm:$0xff]
        %v199 = vld [vmem:[%s176 + $0x88] sm:$0xff]
        %v200 = vld [vmem:[%s176 + $0x90] sm:$0xff]
        %v201 = vld [vmem:[%s176 + $0x98] sm:$0xff]
        %v202 = vld [vmem:[%s176 + $0xa0] sm:$0xff]
        %v203 = vld [vmem:[%s176 + $0xa8] sm:$0xff]
        %v204 = vld [vmem:[%s176 + $0xb0] sm:$0xff]
        %v205 = vld [vmem:[%s176 + $0xb8] sm:$0xff]
        %v206 = vld [vmem:[%s176 + $0xc0] sm:$0xff]
        %v207 = vld [vmem:[%s176 + $0xc8] sm:$0xff]
        %v208 = vld [vmem:[%s176 + $0xd0] sm:$0xff]
        %v209 = vld [vmem:[%s176 + $0xd8] sm:$0xff]
        %v210 = vld [vmem:[%s176 + $0xe0] sm:$0xff]
        %v211 = vld [vmem:[%s176 + $0xe8] sm:$0xff]
        %v212 = vld [vmem:[%s176 + $0xf0] sm:$0xff]
        %v213 = vld [vmem:[%s176 + $0xf8] sm:$0xff]
        %vm214 = vcmask 31744
        %215 = vst.msk [vmem:[#allocation2] sm:$0xff] %vm214, 0.0
        %216 = vst.msk [vmem:[#allocation2 + $0x8] sm:$0xff] %vm214, 0.0
        %vm217 = vcmask 25600
        %218 = vst.msk [vmem:[#allocation2 + $0x10] sm:$0x3] %vm217, 0.0
        %s219 = scalar_lea.vmem [#allocation2], 408
        %220 = vst.msk [vmem:[%s219] sm:$0xff] %vm214, 0.0
        %221 = vst.msk [vmem:[%s219 + $0x8] sm:$0xff] %vm214, 0.0
        %222 = vst.msk [vmem:[%s219 + $0x10] sm:$0x3] %vm217, 0.0
        %vm223 = vcmask 24576
        %224 = vst.msk [vmem:[#allocation2] sm:$0x1] %vm223, 0.0
        %225 = vst.msk [vmem:[#allocation2 + $0x18] sm:$0x1] %vm223, 0.0
        %226 = vst.msk [vmem:[#allocation2 + $0x30] sm:$0x1] %vm223, 0.0
        %227 = vst.msk [vmem:[#allocation2 + $0x48] sm:$0x1] %vm223, 0.0
        %228 = vst.msk [vmem:[#allocation2 + $0x60] sm:$0x1] %vm223, 0.0
        %229 = vst.msk [vmem:[#allocation2 + $0x78] sm:$0x1] %vm223, 0.0
        %230 = vst.msk [vmem:[#allocation2 + $0x90] sm:$0x1] %vm223, 0.0
        %231 = vst.msk [vmem:[#allocation2 + $0xa8] sm:$0x1] %vm223, 0.0
        %232 = vst.msk [vmem:[#allocation2 + $0xc0] sm:$0x1] %vm223, 0.0
        %233 = vst.msk [vmem:[#allocation2 + $0xd8] sm:$0x1] %vm223, 0.0
        %234 = vst.msk [vmem:[#allocation2 + $0xf0] sm:$0x1] %vm223, 0.0
        %235 = vst.msk [vmem:[#allocation2 + $0x108] sm:$0x1] %vm223, 0.0
        %236 = vst.msk [vmem:[#allocation2 + $0x120] sm:$0x1] %vm223, 0.0
        %237 = vst.msk [vmem:[#allocation2 + $0x138] sm:$0x1] %vm223, 0.0
        %238 = vst.msk [vmem:[#allocation2 + $0x150] sm:$0x1] %vm223, 0.0
        %239 = vst.msk [vmem:[#allocation2 + $0x168] sm:$0x1] %vm223, 0.0
        %240 = vst.msk [vmem:[#allocation2 + $0x180] sm:$0x1] %vm223, 0.0
        %241 = vst.msk [vmem:[#allocation2 + $0x198] sm:$0x1] %vm223, 0.0
        %242 = vst.msk [vmem:[#allocation2 + $0x11] sm:$0x1] %vm223, 0.0
        %243 = vst.msk [vmem:[#allocation2 + $0x29] sm:$0x1] %vm223, 0.0
        %244 = vst.msk [vmem:[#allocation2 + $0x41] sm:$0x1] %vm223, 0.0
        %245 = vst.msk [vmem:[#allocation2 + $0x59] sm:$0x1] %vm223, 0.0
        %246 = vst.msk [vmem:[#allocation2 + $0x71] sm:$0x1] %vm223, 0.0
        %247 = vst.msk [vmem:[#allocation2 + $0x89] sm:$0x1] %vm223, 0.0
        %248 = vst.msk [vmem:[#allocation2 + $0xa1] sm:$0x1] %vm223, 0.0
        %249 = vst.msk [vmem:[#allocation2 + $0xb9] sm:$0x1] %vm223, 0.0
        %250 = vst.msk [vmem:[#allocation2 + $0xd1] sm:$0x1] %vm223, 0.0
        %251 = vst.msk [vmem:[#allocation2 + $0xe9] sm:$0x1] %vm223, 0.0
        %252 = vst.msk [vmem:[#allocation2 + $0x101] sm:$0x1] %vm223, 0.0
        %253 = vst.msk [vmem:[#allocation2 + $0x119] sm:$0x1] %vm223, 0.0
        %254 = vst.msk [vmem:[#allocation2 + $0x131] sm:$0x1] %vm223, 0.0
        %255 = vst.msk [vmem:[#allocation2 + $0x149] sm:$0x1] %vm223, 0.0
        %256 = vst.msk [vmem:[#allocation2 + $0x161] sm:$0x1] %vm223, 0.0
        %257 = vst.msk [vmem:[#allocation2 + $0x179] sm:$0x1] %vm223, 0.0
        %258 = vst.msk [vmem:[#allocation2 + $0x191] sm:$0x1] %vm223, 0.0
        %259 = vst.msk [vmem:[#allocation2 + $0x1a9] sm:$0x1] %vm223, 0.0
        %s260 = scalar_lea.vmem [#allocation2], 24
        %261 = vst.msk [vmem:[%s260 + $0x1] sm:$0xff] %vm214, %v182
        %262 = vst.msk [vmem:[%s260 + $0x9] sm:$0xff] %vm214, %v183
        %263 = vst.msk [vmem:[%s260 + $0x19] sm:$0xff] %vm214, %v184
        %264 = vst.msk [vmem:[%s260 + $0x21] sm:$0xff] %vm214, %v185
        %265 = vst.msk [vmem:[%s260 + $0x31] sm:$0xff] %vm214, %v186
        %266 = vst.msk [vmem:[%s260 + $0x39] sm:$0xff] %vm214, %v187
        %267 = vst.msk [vmem:[%s260 + $0x49] sm:$0xff] %vm214, %v188
        %268 = vst.msk [vmem:[%s260 + $0x51] sm:$0xff] %vm214, %v189
        %269 = vst.msk [vmem:[%s260 + $0x61] sm:$0xff] %vm214, %v190
        %270 = vst.msk [vmem:[%s260 + $0x69] sm:$0xff] %vm214, %v191
        %271 = vst.msk [vmem:[%s260 + $0x79] sm:$0xff] %vm214, %v192
        %272 = vst.msk [vmem:[%s260 + $0x81] sm:$0xff] %vm214, %v193
        %273 = vst.msk [vmem:[%s260 + $0x91] sm:$0xff] %vm214, %v194
        %274 = vst.msk [vmem:[%s260 + $0x99] sm:$0xff] %vm214, %v195
        %275 = vst.msk [vmem:[%s260 + $0xa9] sm:$0xff] %vm214, %v196
        %276 = vst.msk [vmem:[%s260 + $0xb1] sm:$0xff] %vm214, %v197
        %277 = vst.msk [vmem:[%s260 + $0xc1] sm:$0xff] %vm214, %v198
        %278 = vst.msk [vmem:[%s260 + $0xc9] sm:$0xff] %vm214, %v199
        %279 = vst.msk [vmem:[%s260 + $0xd9] sm:$0xff] %vm214, %v200
        %280 = vst.msk [vmem:[%s260 + $0xe1] sm:$0xff] %vm214, %v201
        %281 = vst.msk [vmem:[%s260 + $0xf1] sm:$0xff] %vm214, %v202
        %282 = vst.msk [vmem:[%s260 + $0xf9] sm:$0xff] %vm214, %v203
        %283 = vst.msk [vmem:[%s260 + $0x109] sm:$0xff] %vm214, %v204
        %284 = vst.msk [vmem:[%s260 + $0x111] sm:$0xff] %vm214, %v205
        %285 = vst.msk [vmem:[%s260 + $0x121] sm:$0xff] %vm214, %v206
        %286 = vst.msk [vmem:[%s260 + $0x129] sm:$0xff] %vm214, %v207
        %287 = vst.msk [vmem:[%s260 + $0x139] sm:$0xff] %vm214, %v208
        %288 = vst.msk [vmem:[%s260 + $0x141] sm:$0xff] %vm214, %v209
        %289 = vst.msk [vmem:[%s260 + $0x151] sm:$0xff] %vm214, %v210
        %290 = vst.msk [vmem:[%s260 + $0x159] sm:$0xff] %vm214, %v211
        %291 = vst.msk [vmem:[%s260 + $0x169] sm:$0xff] %vm214, %v212
        %292 = vst.msk [vmem:[%s260 + $0x171] sm:$0xff] %vm214, %v213
        %v293 = vld [vmem:[#allocation2] sm:$0xff]
        %v294 = vld [vmem:[#allocation2 + $0x8] sm:$0xff]
        %v295 = vld [vmem:[#allocation2 + $0x18] sm:$0xff]
        %v296 = vld [vmem:[#allocation2 + $0x20] sm:$0xff]
        %v297 = vld [vmem:[#allocation2 + $0x30] sm:$0xff]
        %v298 = vld [vmem:[#allocation2 + $0x38] sm:$0xff]
        %v299 = vld [vmem:[#allocation2 + $0x48] sm:$0xff]
        %v300 = vld [vmem:[#allocation2 + $0x50] sm:$0xff]
        %v301 = vld [vmem:[#allocation2 + $0x60] sm:$0xff]
        %v302 = vld [vmem:[#allocation2 + $0x68] sm:$0xff]
        %v303 = vld [vmem:[#allocation2 + $0x78] sm:$0xff]
        %v304 = vld [vmem:[#allocation2 + $0x80] sm:$0xff]
        %v305 = vld [vmem:[#allocation2 + $0x90] sm:$0xff]
        %v306 = vld [vmem:[#allocation2 + $0x98] sm:$0xff]
        %v307 = vld [vmem:[#allocation2 + $0xa8] sm:$0xff]
        %v308 = vld [vmem:[#allocation2 + $0xb0] sm:$0xff]
        %v309 = vld [vmem:[#allocation2 + $0xc0] sm:$0xff]
        %v310 = vld [vmem:[#allocation2 + $0xc8] sm:$0xff]
        %v311 = vld [vmem:[#allocation2 + $0xd8] sm:$0xff]
        %v312 = vld [vmem:[#allocation2 + $0xe0] sm:$0xff]
        %v313 = vld [vmem:[#allocation2 + $0xf0] sm:$0xff]
        %v314 = vld [vmem:[#allocation2 + $0xf8] sm:$0xff]
        %v315 = vld [vmem:[#allocation2 + $0x108] sm:$0xff]
        %v316 = vld [vmem:[#allocation2 + $0x110] sm:$0xff]
        %v317 = vld [vmem:[#allocation2 + $0x120] sm:$0xff]
        %v318 = vld [vmem:[#allocation2 + $0x128] sm:$0xff]
        %v319 = vld [vmem:[#allocation2 + $0x138] sm:$0xff]
        %v320 = vld [vmem:[#allocation2 + $0x140] sm:$0xff]
        %v321 = vld [vmem:[#allocation2 + $0x150] sm:$0xff]
        %v322 = vld [vmem:[#allocation2 + $0x158] sm:$0xff]
        %v323 = vld [vmem:[#allocation2 + $0x168] sm:$0xff]
        %v324 = vld [vmem:[#allocation2 + $0x170] sm:$0xff]
        %325 = vst.msk [vmem:[#allocation3] sm:$0xff] %vm214, %v293
        %326 = vst.msk [vmem:[#allocation3 + $0x8] sm:$0xff] %vm214, %v294
        %327 = vst.msk [vmem:[#allocation3 + $0x10] sm:$0xff] %vm214, %v295
        %328 = vst.msk [vmem:[#allocation3 + $0x18] sm:$0xff] %vm214, %v296
        %329 = vst.msk [vmem:[#allocation3 + $0x20] sm:$0xff] %vm214, %v297
        %330 = vst.msk [vmem:[#allocation3 + $0x28] sm:$0xff] %vm214, %v298
        %331 = vst.msk [vmem:[#allocation3 + $0x30] sm:$0xff] %vm214, %v299
        %332 = vst.msk [vmem:[#allocation3 + $0x38] sm:$0xff] %vm214, %v300
        %333 = vst.msk [vmem:[#allocation3 + $0x40] sm:$0xff] %vm214, %v301
        %334 = vst.msk [vmem:[#allocation3 + $0x48] sm:$0xff] %vm214, %v302
        %335 = vst.msk [vmem:[#allocation3 + $0x50] sm:$0xff] %vm214, %v303
        %336 = vst.msk [vmem:[#allocation3 + $0x58] sm:$0xff] %vm214, %v304
        %337 = vst.msk [vmem:[#allocation3 + $0x60] sm:$0xff] %vm214, %v305
        %338 = vst.msk [vmem:[#allocation3 + $0x68] sm:$0xff] %vm214, %v306
        %339 = vst.msk [vmem:[#allocation3 + $0x70] sm:$0xff] %vm214, %v307
        %340 = vst.msk [vmem:[#allocation3 + $0x78] sm:$0xff] %vm214, %v308
        %341 = vst.msk [vmem:[#allocation3 + $0x80] sm:$0xff] %vm214, %v309
        %342 = vst.msk [vmem:[#allocation3 + $0x88] sm:$0xff] %vm214, %v310
        %343 = vst.msk [vmem:[#allocation3 + $0x90] sm:$0xff] %vm214, %v311
        %344 = vst.msk [vmem:[#allocation3 + $0x98] sm:$0xff] %vm214, %v312
        %345 = vst.msk [vmem:[#allocation3 + $0xa0] sm:$0xff] %vm214, %v313
        %346 = vst.msk [vmem:[#allocation3 + $0xa8] sm:$0xff] %vm214, %v314
        %347 = vst.msk [vmem:[#allocation3 + $0xb0] sm:$0xff] %vm214, %v315
        %348 = vst.msk [vmem:[#allocation3 + $0xb8] sm:$0xff] %vm214, %v316
        %349 = vst.msk [vmem:[#allocation3 + $0xc0] sm:$0xff] %vm214, %v317
        %350 = vst.msk [vmem:[#allocation3 + $0xc8] sm:$0xff] %vm214, %v318
        %351 = vst.msk [vmem:[#allocation3 + $0xd0] sm:$0xff] %vm214, %v319
        %352 = vst.msk [vmem:[#allocation3 + $0xd8] sm:$0xff] %vm214, %v320
        %353 = vst.msk [vmem:[#allocation3 + $0xe0] sm:$0xff] %vm214, %v321
        %354 = vst.msk [vmem:[#allocation3 + $0xe8] sm:$0xff] %vm214, %v322
        %355 = vst.msk [vmem:[#allocation3 + $0xf0] sm:$0xff] %vm214, %v323
        %356 = vst.msk [vmem:[#allocation3 + $0xf8] sm:$0xff] %vm214, %v324
        %v357 = vld [vmem:[#allocation2 + $0x1] sm:$0xff]
        %v358 = vld [vmem:[#allocation2 + $0x9] sm:$0xff]
        %v359 = vld [vmem:[#allocation2 + $0x19] sm:$0xff]
        %v360 = vld [vmem:[#allocation2 + $0x21] sm:$0xff]
        %v361 = vld [vmem:[#allocation2 + $0x31] sm:$0xff]
        %v362 = vld [vmem:[#allocation2 + $0x39] sm:$0xff]
        %v363 = vld [vmem:[#allocation2 + $0x49] sm:$0xff]
        %v364 = vld [vmem:[#allocation2 + $0x51] sm:$0xff]
        %v365 = vld [vmem:[#allocation2 + $0x61] sm:$0xff]
        %v366 = vld [vmem:[#allocation2 + $0x69] sm:$0xff]
        %v367 = vld [vmem:[#allocation2 + $0x79] sm:$0xff]
        %v368 = vld [vmem:[#allocation2 + $0x81] sm:$0xff]
        %v369 = vld [vmem:[#allocation2 + $0x91] sm:$0xff]
        %v370 = vld [vmem:[#allocation2 + $0x99] sm:$0xff]
        %v371 = vld [vmem:[#allocation2 + $0xa9] sm:$0xff]
        %v372 = vld [vmem:[#allocation2 + $0xb1] sm:$0xff]
        %v373 = vld [vmem:[#allocation2 + $0xc1] sm:$0xff]
        %v374 = vld [vmem:[#allocation2 + $0xc9] sm:$0xff]
        %v375 = vld [vmem:[#allocation2 + $0xd9] sm:$0xff]
        %v376 = vld [vmem:[#allocation2 + $0xe1] sm:$0xff]
        %v377 = vld [vmem:[#allocation2 + $0xf1] sm:$0xff]
        %v378 = vld [vmem:[#allocation2 + $0xf9] sm:$0xff]
        %v379 = vld [vmem:[#allocation2 + $0x109] sm:$0xff]
        %v380 = vld [vmem:[#allocation2 + $0x111] sm:$0xff]
        %v381 = vld [vmem:[#allocation2 + $0x121] sm:$0xff]
        %v382 = vld [vmem:[#allocation2 + $0x129] sm:$0xff]
        %v383 = vld [vmem:[#allocation2 + $0x139] sm:$0xff]
        %v384 = vld [vmem:[#allocation2 + $0x141] sm:$0xff]
        %v385 = vld [vmem:[#allocation2 + $0x151] sm:$0xff]
        %v386 = vld [vmem:[#allocation2 + $0x159] sm:$0xff]
        %v387 = vld [vmem:[#allocation2 + $0x169] sm:$0xff]
        %v388 = vld [vmem:[#allocation2 + $0x171] sm:$0xff]
        %421 = vrot.lane.b32.xlu0 %v357, 4
        %v422 = vpop.permute.xlu0 %421
        %423 = vrot.lane.b32.xlu0 %v358, 4
        %v424 = vpop.permute.xlu0 %423
        %425 = vrot.lane.b32.xlu0 %v359, 4
        %v426 = vpop.permute.xlu0 %425
        %427 = vrot.lane.b32.xlu0 %v360, 4
        %v428 = vpop.permute.xlu0 %427
        %429 = vrot.lane.b32.xlu0 %v361, 4
        %v430 = vpop.permute.xlu0 %429
        %431 = vrot.lane.b32.xlu0 %v362, 4
        %v432 = vpop.permute.xlu0 %431
        %433 = vrot.lane.b32.xlu0 %v363, 4
        %v434 = vpop.permute.xlu0 %433
        %435 = vrot.lane.b32.xlu0 %v364, 4
        %v436 = vpop.permute.xlu0 %435
        %437 = vrot.lane.b32.xlu0 %v365, 4
        %v438 = vpop.permute.xlu0 %437
        %439 = vrot.lane.b32.xlu0 %v366, 4
        %v440 = vpop.permute.xlu0 %439
        %441 = vrot.lane.b32.xlu0 %v367, 4
        %v442 = vpop.permute.xlu0 %441
        %443 = vrot.lane.b32.xlu0 %v368, 4
        %v444 = vpop.permute.xlu0 %443
        %445 = vrot.lane.b32.xlu0 %v369, 4
        %v446 = vpop.permute.xlu0 %445
        %447 = vrot.lane.b32.xlu0 %v370, 4
        %v448 = vpop.permute.xlu0 %447
        %449 = vrot.lane.b32.xlu0 %v371, 4
        %v450 = vpop.permute.xlu0 %449
        %451 = vrot.lane.b32.xlu0 %v372, 4
        %v452 = vpop.permute.xlu0 %451
        %453 = vrot.lane.b32.xlu0 %v373, 4
        %v454 = vpop.permute.xlu0 %453
        %455 = vrot.lane.b32.xlu0 %v374, 4
        %v456 = vpop.permute.xlu0 %455
        %457 = vrot.lane.b32.xlu0 %v375, 4
        %v458 = vpop.permute.xlu0 %457
        %459 = vrot.lane.b32.xlu0 %v376, 4
        %v460 = vpop.permute.xlu0 %459
        %461 = vrot.lane.b32.xlu0 %v377, 4
        %v462 = vpop.permute.xlu0 %461
        %463 = vrot.lane.b32.xlu0 %v378, 4
        %v464 = vpop.permute.xlu0 %463
        %465 = vrot.lane.b32.xlu0 %v379, 4
        %v466 = vpop.permute.xlu0 %465
        %467 = vrot.lane.b32.xlu0 %v380, 4
        %v468 = vpop.permute.xlu0 %467
        %469 = vrot.lane.b32.xlu0 %v381, 4
        %v470 = vpop.permute.xlu0 %469
        %471 = vrot.lane.b32.xlu0 %v382, 4
        %v472 = vpop.permute.xlu0 %471
        %473 = vrot.lane.b32.xlu0 %v383, 4
        %v474 = vpop.permute.xlu0 %473
        %475 = vrot.lane.b32.xlu0 %v384, 4
        %v476 = vpop.permute.xlu0 %475
        %477 = vrot.lane.b32.xlu0 %v385, 4
        %v478 = vpop.permute.xlu0 %477
        %479 = vrot.lane.b32.xlu0 %v386, 4
        %v480 = vpop.permute.xlu0 %479
        %481 = vrot.lane.b32.xlu0 %v387, 4
        %v482 = vpop.permute.xlu0 %481
        %483 = vrot.lane.b32.xlu0 %v388, 4
        %v484 = vpop.permute.xlu0 %483
        %vm517 = vcmask 64544
        %518 = vst.msk [vmem:[#allocation3] sm:$0xff] %vm517, %v422
        %519 = vst.msk [vmem:[#allocation3 + $0x8] sm:$0xff] %vm517, %v424
        %520 = vst.msk [vmem:[#allocation3 + $0x10] sm:$0xff] %vm517, %v426
        %521 = vst.msk [vmem:[#allocation3 + $0x18] sm:$0xff] %vm517, %v428
        %522 = vst.msk [vmem:[#allocation3 + $0x20] sm:$0xff] %vm517, %v430
        %523 = vst.msk [vmem:[#allocation3 + $0x28] sm:$0xff] %vm517, %v432
        %524 = vst.msk [vmem:[#allocation3 + $0x30] sm:$0xff] %vm517, %v434
        %525 = vst.msk [vmem:[#allocation3 + $0x38] sm:$0xff] %vm517, %v436
        %526 = vst.msk [vmem:[#allocation3 + $0x40] sm:$0xff] %vm517, %v438
        %527 = vst.msk [vmem:[#allocation3 + $0x48] sm:$0xff] %vm517, %v440
        %528 = vst.msk [vmem:[#allocation3 + $0x50] sm:$0xff] %vm517, %v442
        %529 = vst.msk [vmem:[#allocation3 + $0x58] sm:$0xff] %vm517, %v444
        %530 = vst.msk [vmem:[#allocation3 + $0x60] sm:$0xff] %vm517, %v446
        %531 = vst.msk [vmem:[#allocation3 + $0x68] sm:$0xff] %vm517, %v448
        %532 = vst.msk [vmem:[#allocation3 + $0x70] sm:$0xff] %vm517, %v450
        %533 = vst.msk [vmem:[#allocation3 + $0x78] sm:$0xff] %vm517, %v452
        %534 = vst.msk [vmem:[#allocation3 + $0x80] sm:$0xff] %vm517, %v454
        %535 = vst.msk [vmem:[#allocation3 + $0x88] sm:$0xff] %vm517, %v456
        %536 = vst.msk [vmem:[#allocation3 + $0x90] sm:$0xff] %vm517, %v458
        %537 = vst.msk [vmem:[#allocation3 + $0x98] sm:$0xff] %vm517, %v460
        %538 = vst.msk [vmem:[#allocation3 + $0xa0] sm:$0xff] %vm517, %v462
        %539 = vst.msk [vmem:[#allocation3 + $0xa8] sm:$0xff] %vm517, %v464
        %540 = vst.msk [vmem:[#allocation3 + $0xb0] sm:$0xff] %vm517, %v466
        %541 = vst.msk [vmem:[#allocation3 + $0xb8] sm:$0xff] %vm517, %v468
        %542 = vst.msk [vmem:[#allocation3 + $0xc0] sm:$0xff] %vm517, %v470
        %543 = vst.msk [vmem:[#allocation3 + $0xc8] sm:$0xff] %vm517, %v472
        %544 = vst.msk [vmem:[#allocation3 + $0xd0] sm:$0xff] %vm517, %v474
        %545 = vst.msk [vmem:[#allocation3 + $0xd8] sm:$0xff] %vm517, %v476
        %546 = vst.msk [vmem:[#allocation3 + $0xe0] sm:$0xff] %vm517, %v478
        %547 = vst.msk [vmem:[#allocation3 + $0xe8] sm:$0xff] %vm517, %v480
        %548 = vst.msk [vmem:[#allocation3 + $0xf0] sm:$0xff] %vm517, %v482
        %549 = vst.msk [vmem:[#allocation3 + $0xf8] sm:$0xff] %vm517, %v484
        %v550 = vld [vmem:[#allocation2 + $0x2] sm:$0xff]
        %v551 = vld [vmem:[#allocation2 + $0xa] sm:$0xff]
        %v552 = vld [vmem:[#allocation2 + $0x1a] sm:$0xff]
        %v553 = vld [vmem:[#allocation2 + $0x22] sm:$0xff]
        %v554 = vld [vmem:[#allocation2 + $0x32] sm:$0xff]
        %v555 = vld [vmem:[#allocation2 + $0x3a] sm:$0xff]
        %v556 = vld [vmem:[#allocation2 + $0x4a] sm:$0xff]
        %v557 = vld [vmem:[#allocation2 + $0x52] sm:$0xff]
        %v558 = vld [vmem:[#allocation2 + $0x62] sm:$0xff]
        %v559 = vld [vmem:[#allocation2 + $0x6a] sm:$0xff]
        %v560 = vld [vmem:[#allocation2 + $0x7a] sm:$0xff]
        %v561 = vld [vmem:[#allocation2 + $0x82] sm:$0xff]
        %v562 = vld [vmem:[#allocation2 + $0x92] sm:$0xff]
        %v563 = vld [vmem:[#allocation2 + $0x9a] sm:$0xff]
        %v564 = vld [vmem:[#allocation2 + $0xaa] sm:$0xff]
        %v565 = vld [vmem:[#allocation2 + $0xb2] sm:$0xff]
        %v566 = vld [vmem:[#allocation2 + $0xc2] sm:$0xff]
        %v567 = vld [vmem:[#allocation2 + $0xca] sm:$0xff]
        %v568 = vld [vmem:[#allocation2 + $0xda] sm:$0xff]
        %v569 = vld [vmem:[#allocation2 + $0xe2] sm:$0xff]
        %v570 = vld [vmem:[#allocation2 + $0xf2] sm:$0xff]
        %v571 = vld [vmem:[#allocation2 + $0xfa] sm:$0xff]
        %v572 = vld [vmem:[#allocation2 + $0x10a] sm:$0xff]
        %v573 = vld [vmem:[#allocation2 + $0x112] sm:$0xff]
        %v574 = vld [vmem:[#allocation2 + $0x122] sm:$0xff]
        %v575 = vld [vmem:[#allocation2 + $0x12a] sm:$0xff]
        %v576 = vld [vmem:[#allocation2 + $0x13a] sm:$0xff]
        %v577 = vld [vmem:[#allocation2 + $0x142] sm:$0xff]
        %v578 = vld [vmem:[#allocation2 + $0x152] sm:$0xff]
        %v579 = vld [vmem:[#allocation2 + $0x15a] sm:$0xff]
        %v580 = vld [vmem:[#allocation2 + $0x16a] sm:$0xff]
        %v581 = vld [vmem:[#allocation2 + $0x172] sm:$0xff]
        %614 = vrot.lane.b32.xlu0 %v550, 8
        %v615 = vpop.permute.xlu0 %614
        %616 = vrot.lane.b32.xlu0 %v551, 8
        %v617 = vpop.permute.xlu0 %616
        %618 = vrot.lane.b32.xlu0 %v552, 8
        %v619 = vpop.permute.xlu0 %618
        %620 = vrot.lane.b32.xlu0 %v553, 8
        %v621 = vpop.permute.xlu0 %620
        %622 = vrot.lane.b32.xlu0 %v554, 8
        %v623 = vpop.permute.xlu0 %622
        %624 = vrot.lane.b32.xlu0 %v555, 8
        %v625 = vpop.permute.xlu0 %624
        %626 = vrot.lane.b32.xlu0 %v556, 8
        %v627 = vpop.permute.xlu0 %626
        %628 = vrot.lane.b32.xlu0 %v557, 8
        %v629 = vpop.permute.xlu0 %628
        %630 = vrot.lane.b32.xlu0 %v558, 8
        %v631 = vpop.permute.xlu0 %630
        %632 = vrot.lane.b32.xlu0 %v559, 8
        %v633 = vpop.permute.xlu0 %632
        %634 = vrot.lane.b32.xlu0 %v560, 8
        %v635 = vpop.permute.xlu0 %634
        %636 = vrot.lane.b32.xlu0 %v561, 8
        %v637 = vpop.permute.xlu0 %636
        %638 = vrot.lane.b32.xlu0 %v562, 8
        %v639 = vpop.permute.xlu0 %638
        %640 = vrot.lane.b32.xlu0 %v563, 8
        %v641 = vpop.permute.xlu0 %640
        %642 = vrot.lane.b32.xlu0 %v564, 8
        %v643 = vpop.permute.xlu0 %642
        %644 = vrot.lane.b32.xlu0 %v565, 8
        %v645 = vpop.permute.xlu0 %644
        %646 = vrot.lane.b32.xlu0 %v566, 8
        %v647 = vpop.permute.xlu0 %646
        %648 = vrot.lane.b32.xlu0 %v567, 8
        %v649 = vpop.permute.xlu0 %648
        %650 = vrot.lane.b32.xlu0 %v568, 8
        %v651 = vpop.permute.xlu0 %650
        %652 = vrot.lane.b32.xlu0 %v569, 8
        %v653 = vpop.permute.xlu0 %652
        %654 = vrot.lane.b32.xlu0 %v570, 8
        %v655 = vpop.permute.xlu0 %654
        %656 = vrot.lane.b32.xlu0 %v571, 8
        %v657 = vpop.permute.xlu0 %656
        %658 = vrot.lane.b32.xlu0 %v572, 8
        %v659 = vpop.permute.xlu0 %658
        %660 = vrot.lane.b32.xlu0 %v573, 8
        %v661 = vpop.permute.xlu0 %660
        %662 = vrot.lane.b32.xlu0 %v574, 8
        %v663 = vpop.permute.xlu0 %662
        %664 = vrot.lane.b32.xlu0 %v575, 8
        %v665 = vpop.permute.xlu0 %664
        %666 = vrot.lane.b32.xlu0 %v576, 8
        %v667 = vpop.permute.xlu0 %666
        %668 = vrot.lane.b32.xlu0 %v577, 8
        %v669 = vpop.permute.xlu0 %668
        %670 = vrot.lane.b32.xlu0 %v578, 8
        %v671 = vpop.permute.xlu0 %670
        %672 = vrot.lane.b32.xlu0 %v579, 8
        %v673 = vpop.permute.xlu0 %672
        %674 = vrot.lane.b32.xlu0 %v580, 8
        %v675 = vpop.permute.xlu0 %674
        %676 = vrot.lane.b32.xlu0 %v581, 8
        %v677 = vpop.permute.xlu0 %676
        %vm710 = vcmask 97344
        %711 = vst.msk [vmem:[#allocation3] sm:$0xff] %vm710, %v615
        %712 = vst.msk [vmem:[#allocation3 + $0x8] sm:$0xff] %vm710, %v617
        %713 = vst.msk [vmem:[#allocation3 + $0x10] sm:$0xff] %vm710, %v619
        %714 = vst.msk [vmem:[#allocation3 + $0x18] sm:$0xff] %vm710, %v621
        %715 = vst.msk [vmem:[#allocation3 + $0x20] sm:$0xff] %vm710, %v623
        %716 = vst.msk [vmem:[#allocation3 + $0x28] sm:$0xff] %vm710, %v625
        %717 = vst.msk [vmem:[#allocation3 + $0x30] sm:$0xff] %vm710, %v627
        %718 = vst.msk [vmem:[#allocation3 + $0x38] sm:$0xff] %vm710, %v629
        %719 = vst.msk [vmem:[#allocation3 + $0x40] sm:$0xff] %vm710, %v631
        %720 = vst.msk [vmem:[#allocation3 + $0x48] sm:$0xff] %vm710, %v633
        %721 = vst.msk [vmem:[#allocation3 + $0x50] sm:$0xff] %vm710, %v635
        %722 = vst.msk [vmem:[#allocation3 + $0x58] sm:$0xff] %vm710, %v637
        %723 = vst.msk [vmem:[#allocation3 + $0x60] sm:$0xff] %vm710, %v639
        %724 = vst.msk [vmem:[#allocation3 + $0x68] sm:$0xff] %vm710, %v641
        %725 = vst.msk [vmem:[#allocation3 + $0x70] sm:$0xff] %vm710, %v643
        %726 = vst.msk [vmem:[#allocation3 + $0x78] sm:$0xff] %vm710, %v645
        %727 = vst.msk [vmem:[#allocation3 + $0x80] sm:$0xff] %vm710, %v647
        %728 = vst.msk [vmem:[#allocation3 + $0x88] sm:$0xff] %vm710, %v649
        %729 = vst.msk [vmem:[#allocation3 + $0x90] sm:$0xff] %vm710, %v651
        %730 = vst.msk [vmem:[#allocation3 + $0x98] sm:$0xff] %vm710, %v653
        %731 = vst.msk [vmem:[#allocation3 + $0xa0] sm:$0xff] %vm710, %v655
        %732 = vst.msk [vmem:[#allocation3 + $0xa8] sm:$0xff] %vm710, %v657
        %733 = vst.msk [vmem:[#allocation3 + $0xb0] sm:$0xff] %vm710, %v659
        %734 = vst.msk [vmem:[#allocation3 + $0xb8] sm:$0xff] %vm710, %v661
        %735 = vst.msk [vmem:[#allocation3 + $0xc0] sm:$0xff] %vm710, %v663
        %736 = vst.msk [vmem:[#allocation3 + $0xc8] sm:$0xff] %vm710, %v665
        %737 = vst.msk [vmem:[#allocation3 + $0xd0] sm:$0xff] %vm710, %v667
        %738 = vst.msk [vmem:[#allocation3 + $0xd8] sm:$0xff] %vm710, %v669
        %739 = vst.msk [vmem:[#allocation3 + $0xe0] sm:$0xff] %vm710, %v671
        %740 = vst.msk [vmem:[#allocation3 + $0xe8] sm:$0xff] %vm710, %v673
        %741 = vst.msk [vmem:[#allocation3 + $0xf0] sm:$0xff] %vm710, %v675
        %742 = vst.msk [vmem:[#allocation3 + $0xf8] sm:$0xff] %vm710, %v677
        %v743 = vld [vmem:[%s260] sm:$0xff]
        %v744 = vld [vmem:[%s260 + $0x8] sm:$0xff]
        %v745 = vld [vmem:[%s260 + $0x18] sm:$0xff]
        %v746 = vld [vmem:[%s260 + $0x20] sm:$0xff]
        %v747 = vld [vmem:[%s260 + $0x30] sm:$0xff]
        %v748 = vld [vmem:[%s260 + $0x38] sm:$0xff]
        %v749 = vld [vmem:[%s260 + $0x48] sm:$0xff]
        %v750 = vld [vmem:[%s260 + $0x50] sm:$0xff]
        %v751 = vld [vmem:[%s260 + $0x60] sm:$0xff]
        %v752 = vld [vmem:[%s260 + $0x68] sm:$0xff]
        %v753 = vld [vmem:[%s260 + $0x78] sm:$0xff]
        %v754 = vld [vmem:[%s260 + $0x80] sm:$0xff]
        %v755 = vld [vmem:[%s260 + $0x90] sm:$0xff]
        %v756 = vld [vmem:[%s260 + $0x98] sm:$0xff]
        %v757 = vld [vmem:[%s260 + $0xa8] sm:$0xff]
        %v758 = vld [vmem:[%s260 + $0xb0] sm:$0xff]
        %v759 = vld [vmem:[%s260 + $0xc0] sm:$0xff]
        %v760 = vld [vmem:[%s260 + $0xc8] sm:$0xff]
        %v761 = vld [vmem:[%s260 + $0xd8] sm:$0xff]
        %v762 = vld [vmem:[%s260 + $0xe0] sm:$0xff]
        %v763 = vld [vmem:[%s260 + $0xf0] sm:$0xff]
        %v764 = vld [vmem:[%s260 + $0xf8] sm:$0xff]
        %v765 = vld [vmem:[%s260 + $0x108] sm:$0xff]
        %v766 = vld [vmem:[%s260 + $0x110] sm:$0xff]
        %v767 = vld [vmem:[%s260 + $0x120] sm:$0xff]
        %v768 = vld [vmem:[%s260 + $0x128] sm:$0xff]
        %v769 = vld [vmem:[%s260 + $0x138] sm:$0xff]
        %v770 = vld [vmem:[%s260 + $0x140] sm:$0xff]
        %v771 = vld [vmem:[%s260 + $0x150] sm:$0xff]
        %v772 = vld [vmem:[%s260 + $0x158] sm:$0xff]
        %v773 = vld [vmem:[%s260 + $0x168] sm:$0xff]
        %v774 = vld [vmem:[%s260 + $0x170] sm:$0xff]
        %807 = vrot.lane.b32.xlu0 %v743, 12
        %v808 = vpop.permute.xlu0 %807
        %809 = vrot.lane.b32.xlu0 %v744, 12
        %v810 = vpop.permute.xlu0 %809
        %811 = vrot.lane.b32.xlu0 %v745, 12
        %v812 = vpop.permute.xlu0 %811
        %813 = vrot.lane.b32.xlu0 %v746, 12
        %v814 = vpop.permute.xlu0 %813
        %815 = vrot.lane.b32.xlu0 %v747, 12
        %v816 = vpop.permute.xlu0 %815
        %817 = vrot.lane.b32.xlu0 %v748, 12
        %v818 = vpop.permute.xlu0 %817
        %819 = vrot.lane.b32.xlu0 %v749, 12
        %v820 = vpop.permute.xlu0 %819
        %821 = vrot.lane.b32.xlu0 %v750, 12
        %v822 = vpop.permute.xlu0 %821
        %823 = vrot.lane.b32.xlu0 %v751, 12
        %v824 = vpop.permute.xlu0 %823
        %825 = vrot.lane.b32.xlu0 %v752, 12
        %v826 = vpop.permute.xlu0 %825
        %827 = vrot.lane.b32.xlu0 %v753, 12
        %v828 = vpop.permute.xlu0 %827
        %829 = vrot.lane.b32.xlu0 %v754, 12
        %v830 = vpop.permute.xlu0 %829
        %831 = vrot.lane.b32.xlu0 %v755, 12
        %v832 = vpop.permute.xlu0 %831
        %833 = vrot.lane.b32.xlu0 %v756, 12
        %v834 = vpop.permute.xlu0 %833
        %835 = vrot.lane.b32.xlu0 %v757, 12
        %v836 = vpop.permute.xlu0 %835
        %837 = vrot.lane.b32.xlu0 %v758, 12
        %v838 = vpop.permute.xlu0 %837
        %839 = vrot.lane.b32.xlu0 %v759, 12
        %v840 = vpop.permute.xlu0 %839
        %841 = vrot.lane.b32.xlu0 %v760, 12
        %v842 = vpop.permute.xlu0 %841
        %843 = vrot.lane.b32.xlu0 %v761, 12
        %v844 = vpop.permute.xlu0 %843
        %845 = vrot.lane.b32.xlu0 %v762, 12
        %v846 = vpop.permute.xlu0 %845
        %847 = vrot.lane.b32.xlu0 %v763, 12
        %v848 = vpop.permute.xlu0 %847
        %849 = vrot.lane.b32.xlu0 %v764, 12
        %v850 = vpop.permute.xlu0 %849
        %851 = vrot.lane.b32.xlu0 %v765, 12
        %v852 = vpop.permute.xlu0 %851
        %853 = vrot.lane.b32.xlu0 %v766, 12
        %v854 = vpop.permute.xlu0 %853
        %855 = vrot.lane.b32.xlu0 %v767, 12
        %v856 = vpop.permute.xlu0 %855
        %857 = vrot.lane.b32.xlu0 %v768, 12
        %v858 = vpop.permute.xlu0 %857
        %859 = vrot.lane.b32.xlu0 %v769, 12
        %v860 = vpop.permute.xlu0 %859
        %861 = vrot.lane.b32.xlu0 %v770, 12
        %v862 = vpop.permute.xlu0 %861
        %863 = vrot.lane.b32.xlu0 %v771, 12
        %v864 = vpop.permute.xlu0 %863
        %865 = vrot.lane.b32.xlu0 %v772, 12
        %v866 = vpop.permute.xlu0 %865
        %867 = vrot.lane.b32.xlu0 %v773, 12
        %v868 = vpop.permute.xlu0 %867
        %869 = vrot.lane.b32.xlu0 %v774, 12
        %v870 = vpop.permute.xlu0 %869
        %vm903 = vcmask 130144
        %904 = vst.msk [vmem:[#allocation3] sm:$0xff] %vm903, %v808
        %905 = vst.msk [vmem:[#allocation3 + $0x8] sm:$0xff] %vm903, %v810
        %906 = vst.msk [vmem:[#allocation3 + $0x10] sm:$0xff] %vm903, %v812
        %907 = vst.msk [vmem:[#allocation3 + $0x18] sm:$0xff] %vm903, %v814
        %908 = vst.msk [vmem:[#allocation3 + $0x20] sm:$0xff] %vm903, %v816
        %909 = vst.msk [vmem:[#allocation3 + $0x28] sm:$0xff] %vm903, %v818
        %910 = vst.msk [vmem:[#allocation3 + $0x30] sm:$0xff] %vm903, %v820
        %911 = vst.msk [vmem:[#allocation3 + $0x38] sm:$0xff] %vm903, %v822
        %912 = vst.msk [vmem:[#allocation3 + $0x40] sm:$0xff] %vm903, %v824
        %913 = vst.msk [vmem:[#allocation3 + $0x48] sm:$0xff] %vm903, %v826
        %914 = vst.msk [vmem:[#allocation3 + $0x50] sm:$0xff] %vm903, %v828
        %915 = vst.msk [vmem:[#allocation3 + $0x58] sm:$0xff] %vm903, %v830
        %916 = vst.msk [vmem:[#allocation3 + $0x60] sm:$0xff] %vm903, %v832
        %917 = vst.msk [vmem:[#allocation3 + $0x68] sm:$0xff] %vm903, %v834
        %918 = vst.msk [vmem:[#allocation3 + $0x70] sm:$0xff] %vm903, %v836
        %919 = vst.msk [vmem:[#allocation3 + $0x78] sm:$0xff] %vm903, %v838
        %920 = vst.msk [vmem:[#allocation3 + $0x80] sm:$0xff] %vm903, %v840
        %921 = vst.msk [vmem:[#allocation3 + $0x88] sm:$0xff] %vm903, %v842
        %922 = vst.msk [vmem:[#allocation3 + $0x90] sm:$0xff] %vm903, %v844
        %923 = vst.msk [vmem:[#allocation3 + $0x98] sm:$0xff] %vm903, %v846
        %924 = vst.msk [vmem:[#allocation3 + $0xa0] sm:$0xff] %vm903, %v848
        %925 = vst.msk [vmem:[#allocation3 + $0xa8] sm:$0xff] %vm903, %v850
        %926 = vst.msk [vmem:[#allocation3 + $0xb0] sm:$0xff] %vm903, %v852
        %927 = vst.msk [vmem:[#allocation3 + $0xb8] sm:$0xff] %vm903, %v854
        %928 = vst.msk [vmem:[#allocation3 + $0xc0] sm:$0xff] %vm903, %v856
        %929 = vst.msk [vmem:[#allocation3 + $0xc8] sm:$0xff] %vm903, %v858
        %930 = vst.msk [vmem:[#allocation3 + $0xd0] sm:$0xff] %vm903, %v860
        %931 = vst.msk [vmem:[#allocation3 + $0xd8] sm:$0xff] %vm903, %v862
        %932 = vst.msk [vmem:[#allocation3 + $0xe0] sm:$0xff] %vm903, %v864
        %933 = vst.msk [vmem:[#allocation3 + $0xe8] sm:$0xff] %vm903, %v866
        %934 = vst.msk [vmem:[#allocation3 + $0xf0] sm:$0xff] %vm903, %v868
        %935 = vst.msk [vmem:[#allocation3 + $0xf8] sm:$0xff] %vm903, %v870
        %v936 = vld [vmem:[%s260 + $0x1] sm:$0xff]
        %v937 = vld [vmem:[%s260 + $0x9] sm:$0xff]
        %v938 = vld [vmem:[%s260 + $0x19] sm:$0xff]
        %v939 = vld [vmem:[%s260 + $0x21] sm:$0xff]
        %v940 = vld [vmem:[%s260 + $0x31] sm:$0xff]
        %v941 = vld [vmem:[%s260 + $0x39] sm:$0xff]
        %v942 = vld [vmem:[%s260 + $0x49] sm:$0xff]
        %v943 = vld [vmem:[%s260 + $0x51] sm:$0xff]
        %v944 = vld [vmem:[%s260 + $0x61] sm:$0xff]
        %v945 = vld [vmem:[%s260 + $0x69] sm:$0xff]
        %v946 = vld [vmem:[%s260 + $0x79] sm:$0xff]
        %v947 = vld [vmem:[%s260 + $0x81] sm:$0xff]
        %v948 = vld [vmem:[%s260 + $0x91] sm:$0xff]
        %v949 = vld [vmem:[%s260 + $0x99] sm:$0xff]
        %v950 = vld [vmem:[%s260 + $0xa9] sm:$0xff]
        %v951 = vld [vmem:[%s260 + $0xb1] sm:$0xff]
        %v952 = vld [vmem:[%s260 + $0xc1] sm:$0xff]
        %v953 = vld [vmem:[%s260 + $0xc9] sm:$0xff]
        %v954 = vld [vmem:[%s260 + $0xd9] sm:$0xff]
        %v955 = vld [vmem:[%s260 + $0xe1] sm:$0xff]
        %v956 = vld [vmem:[%s260 + $0xf1] sm:$0xff]
        %v957 = vld [vmem:[%s260 + $0xf9] sm:$0xff]
        %v958 = vld [vmem:[%s260 + $0x109] sm:$0xff]
        %v959 = vld [vmem:[%s260 + $0x111] sm:$0xff]
        %v960 = vld [vmem:[%s260 + $0x121] sm:$0xff]
        %v961 = vld [vmem:[%s260 + $0x129] sm:$0xff]
        %v962 = vld [vmem:[%s260 + $0x139] sm:$0xff]
        %v963 = vld [vmem:[%s260 + $0x141] sm:$0xff]
        %v964 = vld [vmem:[%s260 + $0x151] sm:$0xff]
        %v965 = vld [vmem:[%s260 + $0x159] sm:$0xff]
        %v966 = vld [vmem:[%s260 + $0x169] sm:$0xff]
        %v967 = vld [vmem:[%s260 + $0x171] sm:$0xff]
        %1000 = vrot.lane.b32.xlu0 %v936, 16
        %v1001 = vpop.permute.xlu0 %1000
        %1002 = vrot.lane.b32.xlu0 %v937, 16
        %v1003 = vpop.permute.xlu0 %1002
        %1004 = vrot.lane.b32.xlu0 %v938, 16
        %v1005 = vpop.permute.xlu0 %1004
        %1006 = vrot.lane.b32.xlu0 %v939, 16
        %v1007 = vpop.permute.xlu0 %1006
        %1008 = vrot.lane.b32.xlu0 %v940, 16
        %v1009 = vpop.permute.xlu0 %1008
        %1010 = vrot.lane.b32.xlu0 %v941, 16
        %v1011 = vpop.permute.xlu0 %1010
        %1012 = vrot.lane.b32.xlu0 %v942, 16
        %v1013 = vpop.permute.xlu0 %1012
        %1014 = vrot.lane.b32.xlu0 %v943, 16
        %v1015 = vpop.permute.xlu0 %1014
        %1016 = vrot.lane.b32.xlu0 %v944, 16
        %v1017 = vpop.permute.xlu0 %1016
        %1018 = vrot.lane.b32.xlu0 %v945, 16
        %v1019 = vpop.permute.xlu0 %1018
        %1020 = vrot.lane.b32.xlu0 %v946, 16
        %v1021 = vpop.permute.xlu0 %1020
        %1022 = vrot.lane.b32.xlu0 %v947, 16
        %v1023 = vpop.permute.xlu0 %1022
        %1024 = vrot.lane.b32.xlu0 %v948, 16
        %v1025 = vpop.permute.xlu0 %1024
        %1026 = vrot.lane.b32.xlu0 %v949, 16
        %v1027 = vpop.permute.xlu0 %1026
        %1028 = vrot.lane.b32.xlu0 %v950, 16
        %v1029 = vpop.permute.xlu0 %1028
        %1030 = vrot.lane.b32.xlu0 %v951, 16
        %v1031 = vpop.permute.xlu0 %1030
        %1032 = vrot.lane.b32.xlu0 %v952, 16
        %v1033 = vpop.permute.xlu0 %1032
        %1034 = vrot.lane.b32.xlu0 %v953, 16
        %v1035 = vpop.permute.xlu0 %1034
        %1036 = vrot.lane.b32.xlu0 %v954, 16
        %v1037 = vpop.permute.xlu0 %1036
        %1038 = vrot.lane.b32.xlu0 %v955, 16
        %v1039 = vpop.permute.xlu0 %1038
        %1040 = vrot.lane.b32.xlu0 %v956, 16
        %v1041 = vpop.permute.xlu0 %1040
        %1042 = vrot.lane.b32.xlu0 %v957, 16
        %v1043 = vpop.permute.xlu0 %1042
        %1044 = vrot.lane.b32.xlu0 %v958, 16
        %v1045 = vpop.permute.xlu0 %1044
        %1046 = vrot.lane.b32.xlu0 %v959, 16
        %v1047 = vpop.permute.xlu0 %1046
        %1048 = vrot.lane.b32.xlu0 %v960, 16
        %v1049 = vpop.permute.xlu0 %1048
        %1050 = vrot.lane.b32.xlu0 %v961, 16
        %v1051 = vpop.permute.xlu0 %1050
        %1052 = vrot.lane.b32.xlu0 %v962, 16
        %v1053 = vpop.permute.xlu0 %1052
        %1054 = vrot.lane.b32.xlu0 %v963, 16
        %v1055 = vpop.permute.xlu0 %1054
        %1056 = vrot.lane.b32.xlu0 %v964, 16
        %v1057 = vpop.permute.xlu0 %1056
        %1058 = vrot.lane.b32.xlu0 %v965, 16
        %v1059 = vpop.permute.xlu0 %1058
        %1060 = vrot.lane.b32.xlu0 %v966, 16
        %v1061 = vpop.permute.xlu0 %1060
        %1062 = vrot.lane.b32.xlu0 %v967, 16
        %v1063 = vpop.permute.xlu0 %1062
        %vm1096 = vcmask 162944
        %1097 = vst.msk [vmem:[#allocation3] sm:$0xff] %vm1096, %v1001
        %1098 = vst.msk [vmem:[#allocation3 + $0x8] sm:$0xff] %vm1096, %v1003
        %1099 = vst.msk [vmem:[#allocation3 + $0x10] sm:$0xff] %vm1096, %v1005
        %1100 = vst.msk [vmem:[#allocation3 + $0x18] sm:$0xff] %vm1096, %v1007
        %1101 = vst.msk [vmem:[#allocation3 + $0x20] sm:$0xff] %vm1096, %v1009
        %1102 = vst.msk [vmem:[#allocation3 + $0x28] sm:$0xff] %vm1096, %v1011
        %1103 = vst.msk [vmem:[#allocation3 + $0x30] sm:$0xff] %vm1096, %v1013
        %1104 = vst.msk [vmem:[#allocation3 + $0x38] sm:$0xff] %vm1096, %v1015
        %1105 = vst.msk [vmem:[#allocation3 + $0x40] sm:$0xff] %vm1096, %v1017
        %1106 = vst.msk [vmem:[#allocation3 + $0x48] sm:$0xff] %vm1096, %v1019
        %1107 = vst.msk [vmem:[#allocation3 + $0x50] sm:$0xff] %vm1096, %v1021
        %1108 = vst.msk [vmem:[#allocation3 + $0x58] sm:$0xff] %vm1096, %v1023
        %1109 = vst.msk [vmem:[#allocation3 + $0x60] sm:$0xff] %vm1096, %v1025
        %1110 = vst.msk [vmem:[#allocation3 + $0x68] sm:$0xff] %vm1096, %v1027
        %1111 = vst.msk [vmem:[#allocation3 + $0x70] sm:$0xff] %vm1096, %v1029
        %1112 = vst.msk [vmem:[#allocation3 + $0x78] sm:$0xff] %vm1096, %v1031
        %1113 = vst.msk [vmem:[#allocation3 + $0x80] sm:$0xff] %vm1096, %v1033
        %1114 = vst.msk [vmem:[#allocation3 + $0x88] sm:$0xff] %vm1096, %v1035
        %1115 = vst.msk [vmem:[#allocation3 + $0x90] sm:$0xff] %vm1096, %v1037
        %1116 = vst.msk [vmem:[#allocation3 + $0x98] sm:$0xff] %vm1096, %v1039
        %1117 = vst.msk [vmem:[#allocation3 + $0xa0] sm:$0xff] %vm1096, %v1041
        %1118 = vst.msk [vmem:[#allocation3 + $0xa8] sm:$0xff] %vm1096, %v1043
        %1119 = vst.msk [vmem:[#allocation3 + $0xb0] sm:$0xff] %vm1096, %v1045
        %1120 = vst.msk [vmem:[#allocation3 + $0xb8] sm:$0xff] %vm1096, %v1047
        %1121 = vst.msk [vmem:[#allocation3 + $0xc0] sm:$0xff] %vm1096, %v1049
        %1122 = vst.msk [vmem:[#allocation3 + $0xc8] sm:$0xff] %vm1096, %v1051
        %1123 = vst.msk [vmem:[#allocation3 + $0xd0] sm:$0xff] %vm1096, %v1053
        %1124 = vst.msk [vmem:[#allocation3 + $0xd8] sm:$0xff] %vm1096, %v1055
        %1125 = vst.msk [vmem:[#allocation3 + $0xe0] sm:$0xff] %vm1096, %v1057
        %1126 = vst.msk [vmem:[#allocation3 + $0xe8] sm:$0xff] %vm1096, %v1059
        %1127 = vst.msk [vmem:[#allocation3 + $0xf0] sm:$0xff] %vm1096, %v1061
        %1128 = vst.msk [vmem:[#allocation3 + $0xf8] sm:$0xff] %vm1096, %v1063
        %v1129 = vld [vmem:[%s260 + $0x2] sm:$0xff]
        %v1130 = vld [vmem:[%s260 + $0xa] sm:$0xff]
        %v1131 = vld [vmem:[%s260 + $0x1a] sm:$0xff]
        %v1132 = vld [vmem:[%s260 + $0x22] sm:$0xff]
        %v1133 = vld [vmem:[%s260 + $0x32] sm:$0xff]
        %v1134 = vld [vmem:[%s260 + $0x3a] sm:$0xff]
        %v1135 = vld [vmem:[%s260 + $0x4a] sm:$0xff]
        %v1136 = vld [vmem:[%s260 + $0x52] sm:$0xff]
        %v1137 = vld [vmem:[%s260 + $0x62] sm:$0xff]
        %v1138 = vld [vmem:[%s260 + $0x6a] sm:$0xff]
        %v1139 = vld [vmem:[%s260 + $0x7a] sm:$0xff]
        %v1140 = vld [vmem:[%s260 + $0x82] sm:$0xff]
        %v1141 = vld [vmem:[%s260 + $0x92] sm:$0xff]
        %v1142 = vld [vmem:[%s260 + $0x9a] sm:$0xff]
        %v1143 = vld [vmem:[%s260 + $0xaa] sm:$0xff]
        %v1144 = vld [vmem:[%s260 + $0xb2] sm:$0xff]
        %v1145 = vld [vmem:[%s260 + $0xc2] sm:$0xff]
        %v1146 = vld [vmem:[%s260 + $0xca] sm:$0xff]
        %v1147 = vld [vmem:[%s260 + $0xda] sm:$0xff]
        %v1148 = vld [vmem:[%s260 + $0xe2] sm:$0xff]
        %v1149 = vld [vmem:[%s260 + $0xf2] sm:$0xff]
        %v1150 = vld [vmem:[%s260 + $0xfa] sm:$0xff]
        %v1151 = vld [vmem:[%s260 + $0x10a] sm:$0xff]
        %v1152 = vld [vmem:[%s260 + $0x112] sm:$0xff]
        %v1153 = vld [vmem:[%s260 + $0x122] sm:$0xff]
        %v1154 = vld [vmem:[%s260 + $0x12a] sm:$0xff]
        %v1155 = vld [vmem:[%s260 + $0x13a] sm:$0xff]
        %v1156 = vld [vmem:[%s260 + $0x142] sm:$0xff]
        %v1157 = vld [vmem:[%s260 + $0x152] sm:$0xff]
        %v1158 = vld [vmem:[%s260 + $0x15a] sm:$0xff]
        %v1159 = vld [vmem:[%s260 + $0x16a] sm:$0xff]
        %v1160 = vld [vmem:[%s260 + $0x172] sm:$0xff]
        %1193 = vrot.lane.b32.xlu0 %v1129, 20
        %v1194 = vpop.permute.xlu0 %1193
        %1195 = vrot.lane.b32.xlu0 %v1130, 20
        %v1196 = vpop.permute.xlu0 %1195
        %1197 = vrot.lane.b32.xlu0 %v1131, 20
        %v1198 = vpop.permute.xlu0 %1197
        %1199 = vrot.lane.b32.xlu0 %v1132, 20
        %v1200 = vpop.permute.xlu0 %1199
        %1201 = vrot.lane.b32.xlu0 %v1133, 20
        %v1202 = vpop.permute.xlu0 %1201
        %1203 = vrot.lane.b32.xlu0 %v1134, 20
        %v1204 = vpop.permute.xlu0 %1203
        %1205 = vrot.lane.b32.xlu0 %v1135, 20
        %v1206 = vpop.permute.xlu0 %1205
        %1207 = vrot.lane.b32.xlu0 %v1136, 20
        %v1208 = vpop.permute.xlu0 %1207
        %1209 = vrot.lane.b32.xlu0 %v1137, 20
        %v1210 = vpop.permute.xlu0 %1209
        %1211 = vrot.lane.b32.xlu0 %v1138, 20
        %v1212 = vpop.permute.xlu0 %1211
        %1213 = vrot.lane.b32.xlu0 %v1139, 20
        %v1214 = vpop.permute.xlu0 %1213
        %1215 = vrot.lane.b32.xlu0 %v1140, 20
        %v1216 = vpop.permute.xlu0 %1215
        %1217 = vrot.lane.b32.xlu0 %v1141, 20
        %v1218 = vpop.permute.xlu0 %1217
        %1219 = vrot.lane.b32.xlu0 %v1142, 20
        %v1220 = vpop.permute.xlu0 %1219
        %1221 = vrot.lane.b32.xlu0 %v1143, 20
        %v1222 = vpop.permute.xlu0 %1221
        %1223 = vrot.lane.b32.xlu0 %v1144, 20
        %v1224 = vpop.permute.xlu0 %1223
        %1225 = vrot.lane.b32.xlu0 %v1145, 20
        %v1226 = vpop.permute.xlu0 %1225
        %1227 = vrot.lane.b32.xlu0 %v1146, 20
        %v1228 = vpop.permute.xlu0 %1227
        %1229 = vrot.lane.b32.xlu0 %v1147, 20
        %v1230 = vpop.permute.xlu0 %1229
        %1231 = vrot.lane.b32.xlu0 %v1148, 20
        %v1232 = vpop.permute.xlu0 %1231
        %1233 = vrot.lane.b32.xlu0 %v1149, 20
        %v1234 = vpop.permute.xlu0 %1233
        %1235 = vrot.lane.b32.xlu0 %v1150, 20
        %v1236 = vpop.permute.xlu0 %1235
        %1237 = vrot.lane.b32.xlu0 %v1151, 20
        %v1238 = vpop.permute.xlu0 %1237
        %1239 = vrot.lane.b32.xlu0 %v1152, 20
        %v1240 = vpop.permute.xlu0 %1239
        %1241 = vrot.lane.b32.xlu0 %v1153, 20
        %v1242 = vpop.permute.xlu0 %1241
        %1243 = vrot.lane.b32.xlu0 %v1154, 20
        %v1244 = vpop.permute.xlu0 %1243
        %1245 = vrot.lane.b32.xlu0 %v1155, 20
        %v1246 = vpop.permute.xlu0 %1245
        %1247 = vrot.lane.b32.xlu0 %v1156, 20
        %v1248 = vpop.permute.xlu0 %1247
        %1249 = vrot.lane.b32.xlu0 %v1157, 20
        %v1250 = vpop.permute.xlu0 %1249
        %1251 = vrot.lane.b32.xlu0 %v1158, 20
        %v1252 = vpop.permute.xlu0 %1251
        %1253 = vrot.lane.b32.xlu0 %v1159, 20
        %v1254 = vpop.permute.xlu0 %1253
        %1255 = vrot.lane.b32.xlu0 %v1160, 20
        %v1256 = vpop.permute.xlu0 %1255
        %vm1289 = vcmask 195744
        %1290 = vst.msk [vmem:[#allocation3] sm:$0xff] %vm1289, %v1194
        %1291 = vst.msk [vmem:[#allocation3 + $0x8] sm:$0xff] %vm1289, %v1196
        %1292 = vst.msk [vmem:[#allocation3 + $0x10] sm:$0xff] %vm1289, %v1198
        %1293 = vst.msk [vmem:[#allocation3 + $0x18] sm:$0xff] %vm1289, %v1200
        %1294 = vst.msk [vmem:[#allocation3 + $0x20] sm:$0xff] %vm1289, %v1202
        %1295 = vst.msk [vmem:[#allocation3 + $0x28] sm:$0xff] %vm1289, %v1204
        %1296 = vst.msk [vmem:[#allocation3 + $0x30] sm:$0xff] %vm1289, %v1206
        %1297 = vst.msk [vmem:[#allocation3 + $0x38] sm:$0xff] %vm1289, %v1208
        %1298 = vst.msk [vmem:[#allocation3 + $0x40] sm:$0xff] %vm1289, %v1210
        %1299 = vst.msk [vmem:[#allocation3 + $0x48] sm:$0xff] %vm1289, %v1212
        %1300 = vst.msk [vmem:[#allocation3 + $0x50] sm:$0xff] %vm1289, %v1214
        %1301 = vst.msk [vmem:[#allocation3 + $0x58] sm:$0xff] %vm1289, %v1216
        %1302 = vst.msk [vmem:[#allocation3 + $0x60] sm:$0xff] %vm1289, %v1218
        %1303 = vst.msk [vmem:[#allocation3 + $0x68] sm:$0xff] %vm1289, %v1220
        %1304 = vst.msk [vmem:[#allocation3 + $0x70] sm:$0xff] %vm1289, %v1222
        %1305 = vst.msk [vmem:[#allocation3 + $0x78] sm:$0xff] %vm1289, %v1224
        %1306 = vst.msk [vmem:[#allocation3 + $0x80] sm:$0xff] %vm1289, %v1226
        %1307 = vst.msk [vmem:[#allocation3 + $0x88] sm:$0xff] %vm1289, %v1228
        %1308 = vst.msk [vmem:[#allocation3 + $0x90] sm:$0xff] %vm1289, %v1230
        %1309 = vst.msk [vmem:[#allocation3 + $0x98] sm:$0xff] %vm1289, %v1232
        %1310 = vst.msk [vmem:[#allocation3 + $0xa0] sm:$0xff] %vm1289, %v1234
        %1311 = vst.msk [vmem:[#allocation3 + $0xa8] sm:$0xff] %vm1289, %v1236
        %1312 = vst.msk [vmem:[#allocation3 + $0xb0] sm:$0xff] %vm1289, %v1238
        %1313 = vst.msk [vmem:[#allocation3 + $0xb8] sm:$0xff] %vm1289, %v1240
        %1314 = vst.msk [vmem:[#allocation3 + $0xc0] sm:$0xff] %vm1289, %v1242
        %1315 = vst.msk [vmem:[#allocation3 + $0xc8] sm:$0xff] %vm1289, %v1244
        %1316 = vst.msk [vmem:[#allocation3 + $0xd0] sm:$0xff] %vm1289, %v1246
        %1317 = vst.msk [vmem:[#allocation3 + $0xd8] sm:$0xff] %vm1289, %v1248
        %1318 = vst.msk [vmem:[#allocation3 + $0xe0] sm:$0xff] %vm1289, %v1250
        %1319 = vst.msk [vmem:[#allocation3 + $0xe8] sm:$0xff] %vm1289, %v1252
        %1320 = vst.msk [vmem:[#allocation3 + $0xf0] sm:$0xff] %vm1289, %v1254
        %1321 = vst.msk [vmem:[#allocation3 + $0xf8] sm:$0xff] %vm1289, %v1256
        %s1322 = scalar_lea.vmem [#allocation2], 48
        %v1323 = vld [vmem:[%s1322] sm:$0xff]
        %v1324 = vld [vmem:[%s1322 + $0x8] sm:$0xff]
        %v1325 = vld [vmem:[%s1322 + $0x18] sm:$0xff]
        %v1326 = vld [vmem:[%s1322 + $0x20] sm:$0xff]
        %v1327 = vld [vmem:[%s1322 + $0x30] sm:$0xff]
        %v1328 = vld [vmem:[%s1322 + $0x38] sm:$0xff]
        %v1329 = vld [vmem:[%s1322 + $0x48] sm:$0xff]
        %v1330 = vld [vmem:[%s1322 + $0x50] sm:$0xff]
        %v1331 = vld [vmem:[%s1322 + $0x60] sm:$0xff]
        %v1332 = vld [vmem:[%s1322 + $0x68] sm:$0xff]
        %v1333 = vld [vmem:[%s1322 + $0x78] sm:$0xff]
        %v1334 = vld [vmem:[%s1322 + $0x80] sm:$0xff]
        %v1335 = vld [vmem:[%s1322 + $0x90] sm:$0xff]
        %v1336 = vld [vmem:[%s1322 + $0x98] sm:$0xff]
        %v1337 = vld [vmem:[%s1322 + $0xa8] sm:$0xff]
        %v1338 = vld [vmem:[%s1322 + $0xb0] sm:$0xff]
        %v1339 = vld [vmem:[%s1322 + $0xc0] sm:$0xff]
        %v1340 = vld [vmem:[%s1322 + $0xc8] sm:$0xff]
        %v1341 = vld [vmem:[%s1322 + $0xd8] sm:$0xff]
        %v1342 = vld [vmem:[%s1322 + $0xe0] sm:$0xff]
        %v1343 = vld [vmem:[%s1322 + $0xf0] sm:$0xff]
        %v1344 = vld [vmem:[%s1322 + $0xf8] sm:$0xff]
        %v1345 = vld [vmem:[%s1322 + $0x108] sm:$0xff]
        %v1346 = vld [vmem:[%s1322 + $0x110] sm:$0xff]
        %v1347 = vld [vmem:[%s1322 + $0x120] sm:$0xff]
        %v1348 = vld [vmem:[%s1322 + $0x128] sm:$0xff]
        %v1349 = vld [vmem:[%s1322 + $0x138] sm:$0xff]
        %v1350 = vld [vmem:[%s1322 + $0x140] sm:$0xff]
        %v1351 = vld [vmem:[%s1322 + $0x150] sm:$0xff]
        %v1352 = vld [vmem:[%s1322 + $0x158] sm:$0xff]
        %v1353 = vld [vmem:[%s1322 + $0x168] sm:$0xff]
        %v1354 = vld [vmem:[%s1322 + $0x170] sm:$0xff]
        %1387 = vrot.lane.b32.xlu0 %v1323, 24
        %v1388 = vpop.permute.xlu0 %1387
        %1389 = vrot.lane.b32.xlu0 %v1324, 24
        %v1390 = vpop.permute.xlu0 %1389
        %1391 = vrot.lane.b32.xlu0 %v1325, 24
        %v1392 = vpop.permute.xlu0 %1391
        %1393 = vrot.lane.b32.xlu0 %v1326, 24
        %v1394 = vpop.permute.xlu0 %1393
        %1395 = vrot.lane.b32.xlu0 %v1327, 24
        %v1396 = vpop.permute.xlu0 %1395
        %1397 = vrot.lane.b32.xlu0 %v1328, 24
        %v1398 = vpop.permute.xlu0 %1397
        %1399 = vrot.lane.b32.xlu0 %v1329, 24
        %v1400 = vpop.permute.xlu0 %1399
        %1401 = vrot.lane.b32.xlu0 %v1330, 24
        %v1402 = vpop.permute.xlu0 %1401
        %1403 = vrot.lane.b32.xlu0 %v1331, 24
        %v1404 = vpop.permute.xlu0 %1403
        %1405 = vrot.lane.b32.xlu0 %v1332, 24
        %v1406 = vpop.permute.xlu0 %1405
        %1407 = vrot.lane.b32.xlu0 %v1333, 24
        %v1408 = vpop.permute.xlu0 %1407
        %1409 = vrot.lane.b32.xlu0 %v1334, 24
        %v1410 = vpop.permute.xlu0 %1409
        %1411 = vrot.lane.b32.xlu0 %v1335, 24
        %v1412 = vpop.permute.xlu0 %1411
        %1413 = vrot.lane.b32.xlu0 %v1336, 24
        %v1414 = vpop.permute.xlu0 %1413
        %1415 = vrot.lane.b32.xlu0 %v1337, 24
        %v1416 = vpop.permute.xlu0 %1415
        %1417 = vrot.lane.b32.xlu0 %v1338, 24
        %v1418 = vpop.permute.xlu0 %1417
        %1419 = vrot.lane.b32.xlu0 %v1339, 24
        %v1420 = vpop.permute.xlu0 %1419
        %1421 = vrot.lane.b32.xlu0 %v1340, 24
        %v1422 = vpop.permute.xlu0 %1421
        %1423 = vrot.lane.b32.xlu0 %v1341, 24
        %v1424 = vpop.permute.xlu0 %1423
        %1425 = vrot.lane.b32.xlu0 %v1342, 24
        %v1426 = vpop.permute.xlu0 %1425
        %1427 = vrot.lane.b32.xlu0 %v1343, 24
        %v1428 = vpop.permute.xlu0 %1427
        %1429 = vrot.lane.b32.xlu0 %v1344, 24
        %v1430 = vpop.permute.xlu0 %1429
        %1431 = vrot.lane.b32.xlu0 %v1345, 24
        %v1432 = vpop.permute.xlu0 %1431
        %1433 = vrot.lane.b32.xlu0 %v1346, 24
        %v1434 = vpop.permute.xlu0 %1433
        %1435 = vrot.lane.b32.xlu0 %v1347, 24
        %v1436 = vpop.permute.xlu0 %1435
        %1437 = vrot.lane.b32.xlu0 %v1348, 24
        %v1438 = vpop.permute.xlu0 %1437
        %1439 = vrot.lane.b32.xlu0 %v1349, 24
        %v1440 = vpop.permute.xlu0 %1439
        %1441 = vrot.lane.b32.xlu0 %v1350, 24
        %v1442 = vpop.permute.xlu0 %1441
        %1443 = vrot.lane.b32.xlu0 %v1351, 24
        %v1444 = vpop.permute.xlu0 %1443
        %1445 = vrot.lane.b32.xlu0 %v1352, 24
        %v1446 = vpop.permute.xlu0 %1445
        %1447 = vrot.lane.b32.xlu0 %v1353, 24
        %v1448 = vpop.permute.xlu0 %1447
        %1449 = vrot.lane.b32.xlu0 %v1354, 24
        %v1450 = vpop.permute.xlu0 %1449
        %vm1483 = vcmask 228544
        %1484 = vst.msk [vmem:[#allocation3] sm:$0xff] %vm1483, %v1388
        %1485 = vst.msk [vmem:[#allocation3 + $0x8] sm:$0xff] %vm1483, %v1390
        %1486 = vst.msk [vmem:[#allocation3 + $0x10] sm:$0xff] %vm1483, %v1392
        %1487 = vst.msk [vmem:[#allocation3 + $0x18] sm:$0xff] %vm1483, %v1394
        %1488 = vst.msk [vmem:[#allocation3 + $0x20] sm:$0xff] %vm1483, %v1396
        %1489 = vst.msk [vmem:[#allocation3 + $0x28] sm:$0xff] %vm1483, %v1398
        %1490 = vst.msk [vmem:[#allocation3 + $0x30] sm:$0xff] %vm1483, %v1400
        %1491 = vst.msk [vmem:[#allocation3 + $0x38] sm:$0xff] %vm1483, %v1402
        %1492 = vst.msk [vmem:[#allocation3 + $0x40] sm:$0xff] %vm1483, %v1404
        %1493 = vst.msk [vmem:[#allocation3 + $0x48] sm:$0xff] %vm1483, %v1406
        %1494 = vst.msk [vmem:[#allocation3 + $0x50] sm:$0xff] %vm1483, %v1408
        %1495 = vst.msk [vmem:[#allocation3 + $0x58] sm:$0xff] %vm1483, %v1410
        %1496 = vst.msk [vmem:[#allocation3 + $0x60] sm:$0xff] %vm1483, %v1412
        %1497 = vst.msk [vmem:[#allocation3 + $0x68] sm:$0xff] %vm1483, %v1414
        %1498 = vst.msk [vmem:[#allocation3 + $0x70] sm:$0xff] %vm1483, %v1416
        %1499 = vst.msk [vmem:[#allocation3 + $0x78] sm:$0xff] %vm1483, %v1418
        %1500 = vst.msk [vmem:[#allocation3 + $0x80] sm:$0xff] %vm1483, %v1420
        %1501 = vst.msk [vmem:[#allocation3 + $0x88] sm:$0xff] %vm1483, %v1422
        %1502 = vst.msk [vmem:[#allocation3 + $0x90] sm:$0xff] %vm1483, %v1424
        %1503 = vst.msk [vmem:[#allocation3 + $0x98] sm:$0xff] %vm1483, %v1426
        %1504 = vst.msk [vmem:[#allocation3 + $0xa0] sm:$0xff] %vm1483, %v1428
        %1505 = vst.msk [vmem:[#allocation3 + $0xa8] sm:$0xff] %vm1483, %v1430
        %1506 = vst.msk [vmem:[#allocation3 + $0xb0] sm:$0xff] %vm1483, %v1432
        %1507 = vst.msk [vmem:[#allocation3 + $0xb8] sm:$0xff] %vm1483, %v1434
        %1508 = vst.msk [vmem:[#allocation3 + $0xc0] sm:$0xff] %vm1483, %v1436
        %1509 = vst.msk [vmem:[#allocation3 + $0xc8] sm:$0xff] %vm1483, %v1438
        %1510 = vst.msk [vmem:[#allocation3 + $0xd0] sm:$0xff] %vm1483, %v1440
        %1511 = vst.msk [vmem:[#allocation3 + $0xd8] sm:$0xff] %vm1483, %v1442
        %1512 = vst.msk [vmem:[#allocation3 + $0xe0] sm:$0xff] %vm1483, %v1444
        %1513 = vst.msk [vmem:[#allocation3 + $0xe8] sm:$0xff] %vm1483, %v1446
        %1514 = vst.msk [vmem:[#allocation3 + $0xf0] sm:$0xff] %vm1483, %v1448
        %1515 = vst.msk [vmem:[#allocation3 + $0xf8] sm:$0xff] %vm1483, %v1450
        %v1516 = vld [vmem:[%s1322 + $0x1] sm:$0xff]
        %v1517 = vld [vmem:[%s1322 + $0x9] sm:$0xff]
        %v1518 = vld [vmem:[%s1322 + $0x19] sm:$0xff]
        %v1519 = vld [vmem:[%s1322 + $0x21] sm:$0xff]
        %v1520 = vld [vmem:[%s1322 + $0x31] sm:$0xff]
        %v1521 = vld [vmem:[%s1322 + $0x39] sm:$0xff]
        %v1522 = vld [vmem:[%s1322 + $0x49] sm:$0xff]
        %v1523 = vld [vmem:[%s1322 + $0x51] sm:$0xff]
        %v1524 = vld [vmem:[%s1322 + $0x61] sm:$0xff]
        %v1525 = vld [vmem:[%s1322 + $0x69] sm:$0xff]
        %v1526 = vld [vmem:[%s1322 + $0x79] sm:$0xff]
        %v1527 = vld [vmem:[%s1322 + $0x81] sm:$0xff]
        %v1528 = vld [vmem:[%s1322 + $0x91] sm:$0xff]
        %v1529 = vld [vmem:[%s1322 + $0x99] sm:$0xff]
        %v1530 = vld [vmem:[%s1322 + $0xa9] sm:$0xff]
        %v1531 = vld [vmem:[%s1322 + $0xb1] sm:$0xff]
        %v1532 = vld [vmem:[%s1322 + $0xc1] sm:$0xff]
        %v1533 = vld [vmem:[%s1322 + $0xc9] sm:$0xff]
        %v1534 = vld [vmem:[%s1322 + $0xd9] sm:$0xff]
        %v1535 = vld [vmem:[%s1322 + $0xe1] sm:$0xff]
        %v1536 = vld [vmem:[%s1322 + $0xf1] sm:$0xff]
        %v1537 = vld [vmem:[%s1322 + $0xf9] sm:$0xff]
        %v1538 = vld [vmem:[%s1322 + $0x109] sm:$0xff]
        %v1539 = vld [vmem:[%s1322 + $0x111] sm:$0xff]
        %v1540 = vld [vmem:[%s1322 + $0x121] sm:$0xff]
        %v1541 = vld [vmem:[%s1322 + $0x129] sm:$0xff]
        %v1542 = vld [vmem:[%s1322 + $0x139] sm:$0xff]
        %v1543 = vld [vmem:[%s1322 + $0x141] sm:$0xff]
        %v1544 = vld [vmem:[%s1322 + $0x151] sm:$0xff]
        %v1545 = vld [vmem:[%s1322 + $0x159] sm:$0xff]
        %v1546 = vld [vmem:[%s1322 + $0x169] sm:$0xff]
        %v1547 = vld [vmem:[%s1322 + $0x171] sm:$0xff]
        %1580 = vrot.lane.b32.xlu0 %v1516, 28
        %v1581 = vpop.permute.xlu0 %1580
        %1582 = vrot.lane.b32.xlu0 %v1517, 28
        %v1583 = vpop.permute.xlu0 %1582
        %1584 = vrot.lane.b32.xlu0 %v1518, 28
        %v1585 = vpop.permute.xlu0 %1584
        %1586 = vrot.lane.b32.xlu0 %v1519, 28
        %v1587 = vpop.permute.xlu0 %1586
        %1588 = vrot.lane.b32.xlu0 %v1520, 28
        %v1589 = vpop.permute.xlu0 %1588
        %1590 = vrot.lane.b32.xlu0 %v1521, 28
        %v1591 = vpop.permute.xlu0 %1590
        %1592 = vrot.lane.b32.xlu0 %v1522, 28
        %v1593 = vpop.permute.xlu0 %1592
        %1594 = vrot.lane.b32.xlu0 %v1523, 28
        %v1595 = vpop.permute.xlu0 %1594
        %1596 = vrot.lane.b32.xlu0 %v1524, 28
        %v1597 = vpop.permute.xlu0 %1596
        %1598 = vrot.lane.b32.xlu0 %v1525, 28
        %v1599 = vpop.permute.xlu0 %1598
        %1600 = vrot.lane.b32.xlu0 %v1526, 28
        %v1601 = vpop.permute.xlu0 %1600
        %1602 = vrot.lane.b32.xlu0 %v1527, 28
        %v1603 = vpop.permute.xlu0 %1602
        %1604 = vrot.lane.b32.xlu0 %v1528, 28
        %v1605 = vpop.permute.xlu0 %1604
        %1606 = vrot.lane.b32.xlu0 %v1529, 28
        %v1607 = vpop.permute.xlu0 %1606
        %1608 = vrot.lane.b32.xlu0 %v1530, 28
        %v1609 = vpop.permute.xlu0 %1608
        %1610 = vrot.lane.b32.xlu0 %v1531, 28
        %v1611 = vpop.permute.xlu0 %1610
        %1612 = vrot.lane.b32.xlu0 %v1532, 28
        %v1613 = vpop.permute.xlu0 %1612
        %1614 = vrot.lane.b32.xlu0 %v1533, 28
        %v1615 = vpop.permute.xlu0 %1614
        %1616 = vrot.lane.b32.xlu0 %v1534, 28
        %v1617 = vpop.permute.xlu0 %1616
        %1618 = vrot.lane.b32.xlu0 %v1535, 28
        %v1619 = vpop.permute.xlu0 %1618
        %1620 = vrot.lane.b32.xlu0 %v1536, 28
        %v1621 = vpop.permute.xlu0 %1620
        %1622 = vrot.lane.b32.xlu0 %v1537, 28
        %v1623 = vpop.permute.xlu0 %1622
        %1624 = vrot.lane.b32.xlu0 %v1538, 28
        %v1625 = vpop.permute.xlu0 %1624
        %1626 = vrot.lane.b32.xlu0 %v1539, 28
        %v1627 = vpop.permute.xlu0 %1626
        %1628 = vrot.lane.b32.xlu0 %v1540, 28
        %v1629 = vpop.permute.xlu0 %1628
        %1630 = vrot.lane.b32.xlu0 %v1541, 28
        %v1631 = vpop.permute.xlu0 %1630
        %1632 = vrot.lane.b32.xlu0 %v1542, 28
        %v1633 = vpop.permute.xlu0 %1632
        %1634 = vrot.lane.b32.xlu0 %v1543, 28
        %v1635 = vpop.permute.xlu0 %1634
        %1636 = vrot.lane.b32.xlu0 %v1544, 28
        %v1637 = vpop.permute.xlu0 %1636
        %1638 = vrot.lane.b32.xlu0 %v1545, 28
        %v1639 = vpop.permute.xlu0 %1638
        %1640 = vrot.lane.b32.xlu0 %v1546, 28
        %v1641 = vpop.permute.xlu0 %1640
        %1642 = vrot.lane.b32.xlu0 %v1547, 28
        %v1643 = vpop.permute.xlu0 %1642
        %vm1676 = vcmask 261344
        %1677 = vst.msk [vmem:[#allocation3] sm:$0xff] %vm1676, %v1581
        %1678 = vst.msk [vmem:[#allocation3 + $0x8] sm:$0xff] %vm1676, %v1583
        %1679 = vst.msk [vmem:[#allocation3 + $0x10] sm:$0xff] %vm1676, %v1585
        %1680 = vst.msk [vmem:[#allocation3 + $0x18] sm:$0xff] %vm1676, %v1587
        %1681 = vst.msk [vmem:[#allocation3 + $0x20] sm:$0xff] %vm1676, %v1589
        %1682 = vst.msk [vmem:[#allocation3 + $0x28] sm:$0xff] %vm1676, %v1591
        %1683 = vst.msk [vmem:[#allocation3 + $0x30] sm:$0xff] %vm1676, %v1593
        %1684 = vst.msk [vmem:[#allocation3 + $0x38] sm:$0xff] %vm1676, %v1595
        %1685 = vst.msk [vmem:[#allocation3 + $0x40] sm:$0xff] %vm1676, %v1597
        %1686 = vst.msk [vmem:[#allocation3 + $0x48] sm:$0xff] %vm1676, %v1599
        %1687 = vst.msk [vmem:[#allocation3 + $0x50] sm:$0xff] %vm1676, %v1601
        %1688 = vst.msk [vmem:[#allocation3 + $0x58] sm:$0xff] %vm1676, %v1603
        %1689 = vst.msk [vmem:[#allocation3 + $0x60] sm:$0xff] %vm1676, %v1605
        %1690 = vst.msk [vmem:[#allocation3 + $0x68] sm:$0xff] %vm1676, %v1607
        %1691 = vst.msk [vmem:[#allocation3 + $0x70] sm:$0xff] %vm1676, %v1609
        %1692 = vst.msk [vmem:[#allocation3 + $0x78] sm:$0xff] %vm1676, %v1611
        %1693 = vst.msk [vmem:[#allocation3 + $0x80] sm:$0xff] %vm1676, %v1613
        %1694 = vst.msk [vmem:[#allocation3 + $0x88] sm:$0xff] %vm1676, %v1615
        %1695 = vst.msk [vmem:[#allocation3 + $0x90] sm:$0xff] %vm1676, %v1617
        %1696 = vst.msk [vmem:[#allocation3 + $0x98] sm:$0xff] %vm1676, %v1619
        %1697 = vst.msk [vmem:[#allocation3 + $0xa0] sm:$0xff] %vm1676, %v1621
        %1698 = vst.msk [vmem:[#allocation3 + $0xa8] sm:$0xff] %vm1676, %v1623
        %1699 = vst.msk [vmem:[#allocation3 + $0xb0] sm:$0xff] %vm1676, %v1625
        %1700 = vst.msk [vmem:[#allocation3 + $0xb8] sm:$0xff] %vm1676, %v1627
        %1701 = vst.msk [vmem:[#allocation3 + $0xc0] sm:$0xff] %vm1676, %v1629
        %1702 = vst.msk [vmem:[#allocation3 + $0xc8] sm:$0xff] %vm1676, %v1631
        %1703 = vst.msk [vmem:[#allocation3 + $0xd0] sm:$0xff] %vm1676, %v1633
        %1704 = vst.msk [vmem:[#allocation3 + $0xd8] sm:$0xff] %vm1676, %v1635
        %1705 = vst.msk [vmem:[#allocation3 + $0xe0] sm:$0xff] %vm1676, %v1637
        %1706 = vst.msk [vmem:[#allocation3 + $0xe8] sm:$0xff] %vm1676, %v1639
        %1707 = vst.msk [vmem:[#allocation3 + $0xf0] sm:$0xff] %vm1676, %v1641
        %1708 = vst.msk [vmem:[#allocation3 + $0xf8] sm:$0xff] %vm1676, %v1643
        %v1709 = vld [vmem:[%s1322 + $0x2] sm:$0xff]
        %v1710 = vld [vmem:[%s1322 + $0xa] sm:$0xff]
        %v1711 = vld [vmem:[%s1322 + $0x1a] sm:$0xff]
        %v1712 = vld [vmem:[%s1322 + $0x22] sm:$0xff]
        %v1713 = vld [vmem:[%s1322 + $0x32] sm:$0xff]
        %v1714 = vld [vmem:[%s1322 + $0x3a] sm:$0xff]
        %v1715 = vld [vmem:[%s1322 + $0x4a] sm:$0xff]
        %v1716 = vld [vmem:[%s1322 + $0x52] sm:$0xff]
        %v1717 = vld [vmem:[%s1322 + $0x62] sm:$0xff]
        %v1718 = vld [vmem:[%s1322 + $0x6a] sm:$0xff]
        %v1719 = vld [vmem:[%s1322 + $0x7a] sm:$0xff]
        %v1720 = vld [vmem:[%s1322 + $0x82] sm:$0xff]
        %v1721 = vld [vmem:[%s1322 + $0x92] sm:$0xff]
        %v1722 = vld [vmem:[%s1322 + $0x9a] sm:$0xff]
        %v1723 = vld [vmem:[%s1322 + $0xaa] sm:$0xff]
        %v1724 = vld [vmem:[%s1322 + $0xb2] sm:$0xff]
        %v1725 = vld [vmem:[%s1322 + $0xc2] sm:$0xff]
        %v1726 = vld [vmem:[%s1322 + $0xca] sm:$0xff]
        %v1727 = vld [vmem:[%s1322 + $0xda] sm:$0xff]
        %v1728 = vld [vmem:[%s1322 + $0xe2] sm:$0xff]
        %v1729 = vld [vmem:[%s1322 + $0xf2] sm:$0xff]
        %v1730 = vld [vmem:[%s1322 + $0xfa] sm:$0xff]
        %v1731 = vld [vmem:[%s1322 + $0x10a] sm:$0xff]
        %v1732 = vld [vmem:[%s1322 + $0x112] sm:$0xff]
        %v1733 = vld [vmem:[%s1322 + $0x122] sm:$0xff]
        %v1734 = vld [vmem:[%s1322 + $0x12a] sm:$0xff]
        %v1735 = vld [vmem:[%s1322 + $0x13a] sm:$0xff]
        %v1736 = vld [vmem:[%s1322 + $0x142] sm:$0xff]
        %v1737 = vld [vmem:[%s1322 + $0x152] sm:$0xff]
        %v1738 = vld [vmem:[%s1322 + $0x15a] sm:$0xff]
        %v1739 = vld [vmem:[%s1322 + $0x16a] sm:$0xff]
        %v1740 = vld [vmem:[%s1322 + $0x172] sm:$0xff]
        %1773 = vrot.lane.b32.xlu0 %v1709, 32
        %v1774 = vpop.permute.xlu0 %1773
        %1775 = vrot.lane.b32.xlu0 %v1710, 32
        %v1776 = vpop.permute.xlu0 %1775
        %1777 = vrot.lane.b32.xlu0 %v1711, 32
        %v1778 = vpop.permute.xlu0 %1777
        %1779 = vrot.lane.b32.xlu0 %v1712, 32
        %v1780 = vpop.permute.xlu0 %1779
        %1781 = vrot.lane.b32.xlu0 %v1713, 32
        %v1782 = vpop.permute.xlu0 %1781
        %1783 = vrot.lane.b32.xlu0 %v1714, 32
        %v1784 = vpop.permute.xlu0 %1783
        %1785 = vrot.lane.b32.xlu0 %v1715, 32
        %v1786 = vpop.permute.xlu0 %1785
        %1787 = vrot.lane.b32.xlu0 %v1716, 32
        %v1788 = vpop.permute.xlu0 %1787
        %1789 = vrot.lane.b32.xlu0 %v1717, 32
        %v1790 = vpop.permute.xlu0 %1789
        %1791 = vrot.lane.b32.xlu0 %v1718, 32
        %v1792 = vpop.permute.xlu0 %1791
        %1793 = vrot.lane.b32.xlu0 %v1719, 32
        %v1794 = vpop.permute.xlu0 %1793
        %1795 = vrot.lane.b32.xlu0 %v1720, 32
        %v1796 = vpop.permute.xlu0 %1795
        %1797 = vrot.lane.b32.xlu0 %v1721, 32
        %v1798 = vpop.permute.xlu0 %1797
        %1799 = vrot.lane.b32.xlu0 %v1722, 32
        %v1800 = vpop.permute.xlu0 %1799
        %1801 = vrot.lane.b32.xlu0 %v1723, 32
        %v1802 = vpop.permute.xlu0 %1801
        %1803 = vrot.lane.b32.xlu0 %v1724, 32
        %v1804 = vpop.permute.xlu0 %1803
        %1805 = vrot.lane.b32.xlu0 %v1725, 32
        %v1806 = vpop.permute.xlu0 %1805
        %1807 = vrot.lane.b32.xlu0 %v1726, 32
        %v1808 = vpop.permute.xlu0 %1807
        %1809 = vrot.lane.b32.xlu0 %v1727, 32
        %v1810 = vpop.permute.xlu0 %1809
        %1811 = vrot.lane.b32.xlu0 %v1728, 32
        %v1812 = vpop.permute.xlu0 %1811
        %1813 = vrot.lane.b32.xlu0 %v1729, 32
        %v1814 = vpop.permute.xlu0 %1813
        %1815 = vrot.lane.b32.xlu0 %v1730, 32
        %v1816 = vpop.permute.xlu0 %1815
        %1817 = vrot.lane.b32.xlu0 %v1731, 32
        %v1818 = vpop.permute.xlu0 %1817
        %1819 = vrot.lane.b32.xlu0 %v1732, 32
        %v1820 = vpop.permute.xlu0 %1819
        %1821 = vrot.lane.b32.xlu0 %v1733, 32
        %v1822 = vpop.permute.xlu0 %1821
        %1823 = vrot.lane.b32.xlu0 %v1734, 32
        %v1824 = vpop.permute.xlu0 %1823
        %1825 = vrot.lane.b32.xlu0 %v1735, 32
        %v1826 = vpop.permute.xlu0 %1825
        %1827 = vrot.lane.b32.xlu0 %v1736, 32
        %v1828 = vpop.permute.xlu0 %1827
        %1829 = vrot.lane.b32.xlu0 %v1737, 32
        %v1830 = vpop.permute.xlu0 %1829
        %1831 = vrot.lane.b32.xlu0 %v1738, 32
        %v1832 = vpop.permute.xlu0 %1831
        %1833 = vrot.lane.b32.xlu0 %v1739, 32
        %v1834 = vpop.permute.xlu0 %1833
        %1835 = vrot.lane.b32.xlu0 %v1740, 32
        %v1836 = vpop.permute.xlu0 %1835
        %vm1869 = vcmask 294144
        %1870 = vst.msk [vmem:[#allocation3] sm:$0xff] %vm1869, %v1774
        %1871 = vst.msk [vmem:[#allocation3 + $0x8] sm:$0xff] %vm1869, %v1776
        %1872 = vst.msk [vmem:[#allocation3 + $0x10] sm:$0xff] %vm1869, %v1778
        %1873 = vst.msk [vmem:[#allocation3 + $0x18] sm:$0xff] %vm1869, %v1780
        %1874 = vst.msk [vmem:[#allocation3 + $0x20] sm:$0xff] %vm1869, %v1782
        %1875 = vst.msk [vmem:[#allocation3 + $0x28] sm:$0xff] %vm1869, %v1784
        %1876 = vst.msk [vmem:[#allocation3 + $0x30] sm:$0xff] %vm1869, %v1786
        %1877 = vst.msk [vmem:[#allocation3 + $0x38] sm:$0xff] %vm1869, %v1788
        %1878 = vst.msk [vmem:[#allocation3 + $0x40] sm:$0xff] %vm1869, %v1790
        %1879 = vst.msk [vmem:[#allocation3 + $0x48] sm:$0xff] %vm1869, %v1792
        %1880 = vst.msk [vmem:[#allocation3 + $0x50] sm:$0xff] %vm1869, %v1794
        %1881 = vst.msk [vmem:[#allocation3 + $0x58] sm:$0xff] %vm1869, %v1796
        %1882 = vst.msk [vmem:[#allocation3 + $0x60] sm:$0xff] %vm1869, %v1798
        %1883 = vst.msk [vmem:[#allocation3 + $0x68] sm:$0xff] %vm1869, %v1800
        %1884 = vst.msk [vmem:[#allocation3 + $0x70] sm:$0xff] %vm1869, %v1802
        %1885 = vst.msk [vmem:[#allocation3 + $0x78] sm:$0xff] %vm1869, %v1804
        %1886 = vst.msk [vmem:[#allocation3 + $0x80] sm:$0xff] %vm1869, %v1806
        %1887 = vst.msk [vmem:[#allocation3 + $0x88] sm:$0xff] %vm1869, %v1808
        %1888 = vst.msk [vmem:[#allocation3 + $0x90] sm:$0xff] %vm1869, %v1810
        %1889 = vst.msk [vmem:[#allocation3 + $0x98] sm:$0xff] %vm1869, %v1812
        %1890 = vst.msk [vmem:[#allocation3 + $0xa0] sm:$0xff] %vm1869, %v1814
        %1891 = vst.msk [vmem:[#allocation3 + $0xa8] sm:$0xff] %vm1869, %v1816
        %1892 = vst.msk [vmem:[#allocation3 + $0xb0] sm:$0xff] %vm1869, %v1818
        %1893 = vst.msk [vmem:[#allocation3 + $0xb8] sm:$0xff] %vm1869, %v1820
        %1894 = vst.msk [vmem:[#allocation3 + $0xc0] sm:$0xff] %vm1869, %v1822
        %1895 = vst.msk [vmem:[#allocation3 + $0xc8] sm:$0xff] %vm1869, %v1824
        %1896 = vst.msk [vmem:[#allocation3 + $0xd0] sm:$0xff] %vm1869, %v1826
        %1897 = vst.msk [vmem:[#allocation3 + $0xd8] sm:$0xff] %vm1869, %v1828
        %1898 = vst.msk [vmem:[#allocation3 + $0xe0] sm:$0xff] %vm1869, %v1830
        %1899 = vst.msk [vmem:[#allocation3 + $0xe8] sm:$0xff] %vm1869, %v1832
        %1900 = vst.msk [vmem:[#allocation3 + $0xf0] sm:$0xff] %vm1869, %v1834
        %1901 = vst.msk [vmem:[#allocation3 + $0xf8] sm:$0xff] %vm1869, %v1836
        %v1902 = vld [vmem:[#allocation3] sm:$0xff]
        %v1903 = vld [vmem:[#allocation3 + $0x8] sm:$0xff]
        %v1904 = vld [vmem:[#allocation3 + $0x10] sm:$0xff]
        %v1905 = vld [vmem:[#allocation3 + $0x18] sm:$0xff]
        %v1906 = vld [vmem:[#allocation3 + $0x20] sm:$0xff]
        %v1907 = vld [vmem:[#allocation3 + $0x28] sm:$0xff]
        %v1908 = vld [vmem:[#allocation3 + $0x30] sm:$0xff]
        %v1909 = vld [vmem:[#allocation3 + $0x38] sm:$0xff]
        %v1910 = vld [vmem:[#allocation3 + $0x40] sm:$0xff]
        %v1911 = vld [vmem:[#allocation3 + $0x48] sm:$0xff]
        %v1912 = vld [vmem:[#allocation3 + $0x50] sm:$0xff]
        %v1913 = vld [vmem:[#allocation3 + $0x58] sm:$0xff]
        %v1914 = vld [vmem:[#allocation3 + $0x60] sm:$0xff]
        %v1915 = vld [vmem:[#allocation3 + $0x68] sm:$0xff]
        %v1916 = vld [vmem:[#allocation3 + $0x70] sm:$0xff]
        %v1917 = vld [vmem:[#allocation3 + $0x78] sm:$0xff]
        %v1918 = vld [vmem:[#allocation3 + $0x80] sm:$0xff]
        %v1919 = vld [vmem:[#allocation3 + $0x88] sm:$0xff]
        %v1920 = vld [vmem:[#allocation3 + $0x90] sm:$0xff]
        %v1921 = vld [vmem:[#allocation3 + $0x98] sm:$0xff]
        %v1922 = vld [vmem:[#allocation3 + $0xa0] sm:$0xff]
        %v1923 = vld [vmem:[#allocation3 + $0xa8] sm:$0xff]
        %v1924 = vld [vmem:[#allocation3 + $0xb0] sm:$0xff]
        %v1925 = vld [vmem:[#allocation3 + $0xb8] sm:$0xff]
        %v1926 = vld [vmem:[#allocation3 + $0xc0] sm:$0xff]
        %v1927 = vld [vmem:[#allocation3 + $0xc8] sm:$0xff]
        %v1928 = vld [vmem:[#allocation3 + $0xd0] sm:$0xff]
        %v1929 = vld [vmem:[#allocation3 + $0xd8] sm:$0xff]
        %v1930 = vld [vmem:[#allocation3 + $0xe0] sm:$0xff]
        %v1931 = vld [vmem:[#allocation3 + $0xe8] sm:$0xff]
        %v1932 = vld [vmem:[#allocation3 + $0xf0] sm:$0xff]
        %v1933 = vld [vmem:[#allocation3 + $0xf8] sm:$0xff]
        %v1934 = vld [vmem:[%s1] sm:$0xff]
        %v1935 = vld [vmem:[%s1 + $0x8] sm:$0xff]
        %v1936 = vld [vmem:[%s1 + $0x10] sm:$0xff]
        %v1937 = vld [vmem:[%s1 + $0x18] sm:$0xff]
        %v1938 = vld [vmem:[%s1 + $0x20] sm:$0xf]
        %vm1939 = vcmask 293888
        %v1941 = vsel %vm1939, %v1902, 0
        %v1944 = vsel %vm1939, %v1903, 0
        %v1947 = vsel %vm1939, %v1904, 0
        %v1950 = vsel %vm1939, %v1905, 0
        %v1953 = vsel %vm1939, %v1906, 0
        %v1956 = vsel %vm1939, %v1907, 0
        %v1959 = vsel %vm1939, %v1908, 0
        %v1962 = vsel %vm1939, %v1909, 0
        %v1965 = vsel %vm1939, %v1910, 0
        %v1968 = vsel %vm1939, %v1911, 0
        %v1971 = vsel %vm1939, %v1912, 0
        %v1974 = vsel %vm1939, %v1913, 0
        %v1977 = vsel %vm1939, %v1914, 0
        %v1980 = vsel %vm1939, %v1915, 0
        %v1983 = vsel %vm1939, %v1916, 0
        %v1986 = vsel %vm1939, %v1917, 0
        %v1989 = vsel %vm1939, %v1918, 0
        %v1992 = vsel %vm1939, %v1919, 0
        %v1995 = vsel %vm1939, %v1920, 0
        %v1998 = vsel %vm1939, %v1921, 0
        %v2001 = vsel %vm1939, %v1922, 0
        %v2004 = vsel %vm1939, %v1923, 0
        %v2007 = vsel %vm1939, %v1924, 0
        %v2010 = vsel %vm1939, %v1925, 0
        %v2013 = vsel %vm1939, %v1926, 0
        %v2016 = vsel %vm1939, %v1927, 0
        %v2019 = vsel %vm1939, %v1928, 0
        %v2022 = vsel %vm1939, %v1929, 0
        %v2025 = vsel %vm1939, %v1930, 0
        %v2028 = vsel %vm1939, %v1931, 0
        %v2031 = vsel %vm1939, %v1932, 0
        %v2034 = vsel %vm1939, %v1933, 0
        %vm2036 = vcmask 1043456
        %v2038 = vsel %vm2036, %v1938, 0
        %2040 = vmatprep.subr.mxu0 0.0
        %2041 = vmatpush1.msra.mxu0 %v1934
        %2042 = vmatprep.subr.mxu0 0.0
        %2043 = vmatpush1.msra.mxu0 %v1935
        %2044 = vmatprep.subr.mxu0 0.0
        %2045 = vmatpush1.msra.mxu0 %v1936
        %2046 = vmatprep.subr.mxu0 0.0
        %2047 = vmatpush1.msra.mxu0 %v1937
        %2048 = vmatprep.subr.mxu0 0.0
        %2049 = vmatpush1.msra.mxu0 %v2038
        %2050 = vmatprep.subr.mxu0 0.0
        %2051 = vmatpush1.msra.mxu0 0.0
        %2052 = vmatprep.subr.mxu0 0.0
        %2053 = vmatpush1.msra.mxu0 0.0
        %2054 = vmatprep.subr.mxu0 0.0
        %2055 = vmatpush1.msra.mxu0 0.0
        %2056 = vmatprep.subr.mxu0 0.0
        %2057 = vmatpush1.msra.mxu0 0.0
        %2058 = vmatprep.subr.mxu0 0.0
        %2059 = vmatpush1.msra.mxu0 0.0
        %2060 = vmatprep.subr.mxu0 0.0
        %2061 = vmatpush1.msra.mxu0 0.0
        %2062 = vmatprep.subr.mxu0 0.0
        %2063 = vmatpush1.msra.mxu0 0.0
        %2064 = vmatprep.subr.mxu0 0.0
        %2065 = vmatpush1.msra.mxu0 0.0
        %2066 = vmatprep.subr.mxu0 0.0
        %2067 = vmatpush1.msra.mxu0 0.0
        %2068 = vmatprep.subr.mxu0 0.0
        %2069 = vmatpush1.msra.mxu0 0.0
        %2070 = vmatprep.subr.mxu0 0.0
        %2071 = vmatpush1.msra.mxu0 0.0
        %2072 = vmatprep.subr.mxu0 0.0
        %2073 = vmatpush1.msra.mxu0 0.0
        %2074 = vmatprep.subr.mxu0 0.0
        %2075 = vmatpush1.msra.mxu0 0.0
        %2076 = vmatprep.subr.mxu0 0.0
        %2077 = vmatpush1.msra.mxu0 0.0
        %2078 = vmatprep.subr.mxu0 0.0
        %2079 = vmatpush1.msra.mxu0 0.0
        %2080 = vmatprep.subr.mxu0 0.0
        %2081 = vmatpush1.msra.mxu0 0.0
        %2082 = vmatprep.subr.mxu0 0.0
        %2083 = vmatpush1.msra.mxu0 0.0
        %2084 = vmatprep.subr.mxu0 0.0
        %2085 = vmatpush1.msra.mxu0 0.0
        %2086 = vmatprep.subr.mxu0 0.0
        %2087 = vmatpush1.msra.mxu0 0.0
        %2088 = vmatprep.subr.mxu0 0.0
        %2089 = vmatpush1.msra.mxu0 0.0
        %2090 = vmatprep.subr.mxu0 0.0
        %2091 = vmatpush1.msra.mxu0 0.0
        %2092 = vmatprep.subr.mxu0 0.0
        %2093 = vmatpush1.msra.mxu0 0.0
        %2094 = vmatprep.subr.mxu0 0.0
        %2095 = vmatpush1.msra.mxu0 0.0
        %2096 = vmatprep.subr.mxu0 0.0
        %2097 = vmatpush1.msra.mxu0 0.0
        %2098 = vmatprep.subr.mxu0 0.0
        %2099 = vmatpush1.msra.mxu0 0.0
        %2100 = vmatprep.subr.mxu0 0.0
        %2101 = vmatpush1.msra.mxu0 0.0
        %2102 = vmatprep.subr.mxu0 0.0
        %2103 = vmatpush1.msra.mxu0 0.0
        %2104 = vmatprep.mubr.f32.mxu0 0.0
        %2105 = vmatmul.mubr.f32.gmra.mrb[0].mxu0 %v1941
        %v2106 = vpop.f32.mrb[0].mxu0
        %v2107 = vadd.f32 0.0, %v2106
        %v2108 = vpop.f32.mrb[0].mxu0
        %2109 = vmatprep.mubr.f32.mxu0 0.0
        %2110 = vmatmul.mubr.f32.gmra.mrb[0].mxu0 %v1944
        %v2111 = vpop.f32.mrb[0].mxu0
        %v2112 = vadd.f32 0.0, %v2111
        %v2113 = vpop.f32.mrb[0].mxu0
        %2114 = vmatprep.mubr.f32.mxu0 0.0
        %2115 = vmatmul.mubr.f32.gmra.mrb[0].mxu0 %v1947
        %v2116 = vpop.f32.mrb[0].mxu0
        %v2117 = vadd.f32 0.0, %v2116
        %v2118 = vpop.f32.mrb[0].mxu0
        %2119 = vmatprep.mubr.f32.mxu0 0.0
        %2120 = vmatmul.mubr.f32.gmra.mrb[0].mxu0 %v1950
        %v2121 = vpop.f32.mrb[0].mxu0
        %v2122 = vadd.f32 0.0, %v2121
        %v2123 = vpop.f32.mrb[0].mxu0
        %2124 = vmatprep.mubr.f32.mxu0 0.0
        %2125 = vmatmul.mubr.f32.gmra.mrb[0].mxu0 %v1953
        %v2126 = vpop.f32.mrb[0].mxu0
        %v2127 = vadd.f32 0.0, %v2126
        %v2128 = vpop.f32.mrb[0].mxu0
        %2129 = vmatprep.mubr.f32.mxu0 0.0
        %2130 = vmatmul.mubr.f32.gmra.mrb[0].mxu0 %v1956
        %v2131 = vpop.f32.mrb[0].mxu0
        %v2132 = vadd.f32 0.0, %v2131
        %v2133 = vpop.f32.mrb[0].mxu0
        %2134 = vmatprep.mubr.f32.mxu0 0.0
        %2135 = vmatmul.mubr.f32.gmra.mrb[0].mxu0 %v1959
        %v2136 = vpop.f32.mrb[0].mxu0
        %v2137 = vadd.f32 0.0, %v2136
        %v2138 = vpop.f32.mrb[0].mxu0
        %2139 = vmatprep.mubr.f32.mxu0 0.0
        %2140 = vmatmul.mubr.f32.gmra.mrb[0].mxu0 %v1962
        %v2141 = vpop.f32.mrb[0].mxu0
        %v2142 = vadd.f32 0.0, %v2141
        %v2143 = vpop.f32.mrb[0].mxu0
        %2144 = vmatprep.mubr.f32.mxu0 0.0
        %2145 = vmatmul.mubr.f32.gmra.mrb[0].mxu0 %v1965
        %v2146 = vpop.f32.mrb[0].mxu0
        %v2147 = vadd.f32 0.0, %v2146
        %v2148 = vpop.f32.mrb[0].mxu0
        %2149 = vmatprep.mubr.f32.mxu0 0.0
        %2150 = vmatmul.mubr.f32.gmra.mrb[0].mxu0 %v1968
        %v2151 = vpop.f32.mrb[0].mxu0
        %v2152 = vadd.f32 0.0, %v2151
        %v2153 = vpop.f32.mrb[0].mxu0
        %2154 = vmatprep.mubr.f32.mxu0 0.0
        %2155 = vmatmul.mubr.f32.gmra.mrb[0].mxu0 %v1971
        %v2156 = vpop.f32.mrb[0].mxu0
        %v2157 = vadd.f32 0.0, %v2156
        %v2158 = vpop.f32.mrb[0].mxu0
        %2159 = vmatprep.mubr.f32.mxu0 0.0
        %2160 = vmatmul.mubr.f32.gmra.mrb[0].mxu0 %v1974
        %v2161 = vpop.f32.mrb[0].mxu0
        %v2162 = vadd.f32 0.0, %v2161
        %v2163 = vpop.f32.mrb[0].mxu0
        %2164 = vmatprep.mubr.f32.mxu0 0.0
        %2165 = vmatmul.mubr.f32.gmra.mrb[0].mxu0 %v1977
        %v2166 = vpop.f32.mrb[0].mxu0
        %v2167 = vadd.f32 0.0, %v2166
        %v2168 = vpop.f32.mrb[0].mxu0
        %2169 = vmatprep.mubr.f32.mxu0 0.0
        %2170 = vmatmul.mubr.f32.gmra.mrb[0].mxu0 %v1980
        %v2171 = vpop.f32.mrb[0].mxu0
        %v2172 = vadd.f32 0.0, %v2171
        %v2173 = vpop.f32.mrb[0].mxu0
        %2174 = vmatprep.mubr.f32.mxu0 0.0
        %2175 = vmatmul.mubr.f32.gmra.mrb[0].mxu0 %v1983
        %v2176 = vpop.f32.mrb[0].mxu0
        %v2177 = vadd.f32 0.0, %v2176
        %v2178 = vpop.f32.mrb[0].mxu0
        %2179 = vmatprep.mubr.f32.mxu0 0.0
        %2180 = vmatmul.mubr.f32.gmra.mrb[0].mxu0 %v1986
        %v2181 = vpop.f32.mrb[0].mxu0
        %v2182 = vadd.f32 0.0, %v2181
        %v2183 = vpop.f32.mrb[0].mxu0
        %2184 = vmatprep.mubr.f32.mxu0 0.0
        %2185 = vmatmul.mubr.f32.gmra.mrb[0].mxu0 %v1989
        %v2186 = vpop.f32.mrb[0].mxu0
        %v2187 = vadd.f32 0.0, %v2186
        %v2188 = vpop.f32.mrb[0].mxu0
        %2189 = vmatprep.mubr.f32.mxu0 0.0
        %2190 = vmatmul.mubr.f32.gmra.mrb[0].mxu0 %v1992
        %v2191 = vpop.f32.mrb[0].mxu0
        %v2192 = vadd.f32 0.0, %v2191
        %v2193 = vpop.f32.mrb[0].mxu0
        %2194 = vmatprep.mubr.f32.mxu0 0.0
        %2195 = vmatmul.mubr.f32.gmra.mrb[0].mxu0 %v1995
        %v2196 = vpop.f32.mrb[0].mxu0
        %v2197 = vadd.f32 0.0, %v2196
        %v2198 = vpop.f32.mrb[0].mxu0
        %2199 = vmatprep.mubr.f32.mxu0 0.0
        %2200 = vmatmul.mubr.f32.gmra.mrb[0].mxu0 %v1998
        %v2201 = vpop.f32.mrb[0].mxu0
        %v2202 = vadd.f32 0.0, %v2201
        %v2203 = vpop.f32.mrb[0].mxu0
        %2204 = vmatprep.mubr.f32.mxu0 0.0
        %2205 = vmatmul.mubr.f32.gmra.mrb[0].mxu0 %v2001
        %v2206 = vpop.f32.mrb[0].mxu0
        %v2207 = vadd.f32 0.0, %v2206
        %v2208 = vpop.f32.mrb[0].mxu0
        %2209 = vmatprep.mubr.f32.mxu0 0.0
        %2210 = vmatmul.mubr.f32.gmra.mrb[0].mxu0 %v2004
        %v2211 = vpop.f32.mrb[0].mxu0
        %v2212 = vadd.f32 0.0, %v2211
        %v2213 = vpop.f32.mrb[0].mxu0
        %2214 = vmatprep.mubr.f32.mxu0 0.0
        %2215 = vmatmul.mubr.f32.gmra.mrb[0].mxu0 %v2007
        %v2216 = vpop.f32.mrb[0].mxu0
        %v2217 = vadd.f32 0.0, %v2216
        %v2218 = vpop.f32.mrb[0].mxu0
        %2219 = vmatprep.mubr.f32.mxu0 0.0
        %2220 = vmatmul.mubr.f32.gmra.mrb[0].mxu0 %v2010
        %v2221 = vpop.f32.mrb[0].mxu0
        %v2222 = vadd.f32 0.0, %v2221
        %v2223 = vpop.f32.mrb[0].mxu0
        %2224 = vmatprep.mubr.f32.mxu0 0.0
        %2225 = vmatmul.mubr.f32.gmra.mrb[0].mxu0 %v2013
        %v2226 = vpop.f32.mrb[0].mxu0
        %v2227 = vadd.f32 0.0, %v2226
        %v2228 = vpop.f32.mrb[0].mxu0
        %2229 = vmatprep.mubr.f32.mxu0 0.0
        %2230 = vmatmul.mubr.f32.gmra.mrb[0].mxu0 %v2016
        %v2231 = vpop.f32.mrb[0].mxu0
        %v2232 = vadd.f32 0.0, %v2231
        %v2233 = vpop.f32.mrb[0].mxu0
        %2234 = vmatprep.mubr.f32.mxu0 0.0
        %2235 = vmatmul.mubr.f32.gmra.mrb[0].mxu0 %v2019
        %v2236 = vpop.f32.mrb[0].mxu0
        %v2237 = vadd.f32 0.0, %v2236
        %v2238 = vpop.f32.mrb[0].mxu0
        %2239 = vmatprep.mubr.f32.mxu0 0.0
        %2240 = vmatmul.mubr.f32.gmra.mrb[0].mxu0 %v2022
        %v2241 = vpop.f32.mrb[0].mxu0
        %v2242 = vadd.f32 0.0, %v2241
        %v2243 = vpop.f32.mrb[0].mxu0
        %2244 = vmatprep.mubr.f32.mxu0 0.0
        %2245 = vmatmul.mubr.f32.gmra.mrb[0].mxu0 %v2025
        %v2246 = vpop.f32.mrb[0].mxu0
        %v2247 = vadd.f32 0.0, %v2246
        %v2248 = vpop.f32.mrb[0].mxu0
        %2249 = vmatprep.mubr.f32.mxu0 0.0
        %2250 = vmatmul.mubr.f32.gmra.mrb[0].mxu0 %v2028
        %v2251 = vpop.f32.mrb[0].mxu0
        %v2252 = vadd.f32 0.0, %v2251
        %v2253 = vpop.f32.mrb[0].mxu0
        %2254 = vmatprep.mubr.f32.mxu0 0.0
        %2255 = vmatmul.mubr.f32.gmra.mrb[0].mxu0 %v2031
        %v2256 = vpop.f32.mrb[0].mxu0
        %v2257 = vadd.f32 0.0, %v2256
        %v2258 = vpop.f32.mrb[0].mxu0
        %2259 = vmatprep.mubr.f32.mxu0 0.0
        %2260 = vmatmul.mubr.f32.gmra.mrb[0].mxu0 %v2034
        %v2261 = vpop.f32.mrb[0].mxu0
        %v2262 = vadd.f32 0.0, %v2261
        %v2263 = vpop.f32.mrb[0].mxu0
        %2264 = vdwg.mxu0
        %2265 = vst.msk [vmem:[%s181] sm:$0xff] %vm214, %v2107
        %2266 = vst.msk [vmem:[%s181 + $0x8] sm:$0xff] %vm214, %v2112
        %2267 = vst.msk [vmem:[%s181 + $0x10] sm:$0xff] %vm214, %v2117
        %2268 = vst.msk [vmem:[%s181 + $0x18] sm:$0xff] %vm214, %v2122
        %2269 = vst.msk [vmem:[%s181 + $0x20] sm:$0xff] %vm214, %v2127
        %2270 = vst.msk [vmem:[%s181 + $0x28] sm:$0xff] %vm214, %v2132
        %2271 = vst.msk [vmem:[%s181 + $0x30] sm:$0xff] %vm214, %v2137
        %2272 = vst.msk [vmem:[%s181 + $0x38] sm:$0xff] %vm214, %v2142
        %2273 = vst.msk [vmem:[%s181 + $0x40] sm:$0xff] %vm214, %v2147
        %2274 = vst.msk [vmem:[%s181 + $0x48] sm:$0xff] %vm214, %v2152
        %2275 = vst.msk [vmem:[%s181 + $0x50] sm:$0xff] %vm214, %v2157
        %2276 = vst.msk [vmem:[%s181 + $0x58] sm:$0xff] %vm214, %v2162
        %2277 = vst.msk [vmem:[%s181 + $0x60] sm:$0xff] %vm214, %v2167
        %2278 = vst.msk [vmem:[%s181 + $0x68] sm:$0xff] %vm214, %v2172
        %2279 = vst.msk [vmem:[%s181 + $0x70] sm:$0xff] %vm214, %v2177
        %2280 = vst.msk [vmem:[%s181 + $0x78] sm:$0xff] %vm214, %v2182
        %2281 = vst.msk [vmem:[%s181 + $0x80] sm:$0xff] %vm214, %v2187
        %2282 = vst.msk [vmem:[%s181 + $0x88] sm:$0xff] %vm214, %v2192
        %2283 = vst.msk [vmem:[%s181 + $0x90] sm:$0xff] %vm214, %v2197
        %2284 = vst.msk [vmem:[%s181 + $0x98] sm:$0xff] %vm214, %v2202
        %2285 = vst.msk [vmem:[%s181 + $0xa0] sm:$0xff] %vm214, %v2207
        %2286 = vst.msk [vmem:[%s181 + $0xa8] sm:$0xff] %vm214, %v2212
        %2287 = vst.msk [vmem:[%s181 + $0xb0] sm:$0xff] %vm214, %v2217
        %2288 = vst.msk [vmem:[%s181 + $0xb8] sm:$0xff] %vm214, %v2222
        %2289 = vst.msk [vmem:[%s181 + $0xc0] sm:$0xff] %vm214, %v2227
        %2290 = vst.msk [vmem:[%s181 + $0xc8] sm:$0xff] %vm214, %v2232
        %2291 = vst.msk [vmem:[%s181 + $0xd0] sm:$0xff] %vm214, %v2237
        %2292 = vst.msk [vmem:[%s181 + $0xd8] sm:$0xff] %vm214, %v2242
        %2293 = vst.msk [vmem:[%s181 + $0xe0] sm:$0xff] %vm214, %v2247
        %2294 = vst.msk [vmem:[%s181 + $0xe8] sm:$0xff] %vm214, %v2252
        %2295 = vst.msk [vmem:[%s181 + $0xf0] sm:$0xff] %vm214, %v2257
        %2296 = vst.msk [vmem:[%s181 + $0xf8] sm:$0xff] %vm214, %v2262
        %v2297 = vsel %vm214, %v2107, 0.0
        %v2298 = vsel %vm214, %v2112, 0.0
        %v2299 = vadd.f32 %v2297, %v2298
        %v2300 = vsel %vm214, %v2117, 0.0
        %v2301 = vadd.f32 %v2299, %v2300
        %v2302 = vsel %vm214, %v2122, 0.0
        %v2303 = vadd.f32 %v2301, %v2302
        %v2304 = vsel %vm214, %v2127, 0.0
        %v2305 = vadd.f32 %v2303, %v2304
        %v2306 = vsel %vm214, %v2132, 0.0
        %v2307 = vadd.f32 %v2305, %v2306
        %v2308 = vsel %vm214, %v2137, 0.0
        %v2309 = vadd.f32 %v2307, %v2308
        %v2310 = vsel %vm214, %v2142, 0.0
        %v2311 = vadd.f32 %v2309, %v2310
        %v2312 = vsel %vm214, %v2147, 0.0
        %v2313 = vadd.f32 %v2311, %v2312
        %v2314 = vsel %vm214, %v2152, 0.0
        %v2315 = vadd.f32 %v2313, %v2314
        %v2316 = vsel %vm214, %v2157, 0.0
        %v2317 = vadd.f32 %v2315, %v2316
        %v2318 = vsel %vm214, %v2162, 0.0
        %v2319 = vadd.f32 %v2317, %v2318
        %v2320 = vsel %vm214, %v2167, 0.0
        %v2321 = vadd.f32 %v2319, %v2320
        %v2322 = vsel %vm214, %v2172, 0.0
        %v2323 = vadd.f32 %v2321, %v2322
        %v2324 = vsel %vm214, %v2177, 0.0
        %v2325 = vadd.f32 %v2323, %v2324
        %v2326 = vsel %vm214, %v2182, 0.0
        %v2327 = vadd.f32 %v2325, %v2326
        %v2328 = vsel %vm214, %v2187, 0.0
        %v2329 = vadd.f32 %v2327, %v2328
        %v2330 = vsel %vm214, %v2192, 0.0
        %v2331 = vadd.f32 %v2329, %v2330
        %v2332 = vsel %vm214, %v2197, 0.0
        %v2333 = vadd.f32 %v2331, %v2332
        %v2334 = vsel %vm214, %v2202, 0.0
        %v2335 = vadd.f32 %v2333, %v2334
        %v2336 = vsel %vm214, %v2207, 0.0
        %v2337 = vadd.f32 %v2335, %v2336
        %v2338 = vsel %vm214, %v2212, 0.0
        %v2339 = vadd.f32 %v2337, %v2338
        %v2340 = vsel %vm214, %v2217, 0.0
        %v2341 = vadd.f32 %v2339, %v2340
        %v2342 = vsel %vm214, %v2222, 0.0
        %v2343 = vadd.f32 %v2341, %v2342
        %v2344 = vsel %vm214, %v2227, 0.0
        %v2345 = vadd.f32 %v2343, %v2344
        %v2346 = vsel %vm214, %v2232, 0.0
        %v2347 = vadd.f32 %v2345, %v2346
        %v2348 = vsel %vm214, %v2237, 0.0
        %v2349 = vadd.f32 %v2347, %v2348
        %v2350 = vsel %vm214, %v2242, 0.0
        %v2351 = vadd.f32 %v2349, %v2350
        %v2352 = vsel %vm214, %v2247, 0.0
        %v2353 = vadd.f32 %v2351, %v2352
        %v2354 = vsel %vm214, %v2252, 0.0
        %v2355 = vadd.f32 %v2353, %v2354
        %v2356 = vsel %vm214, %v2257, 0.0
        %v2357 = vadd.f32 %v2355, %v2356
        %v2358 = vsel %vm214, %v2262, 0.0
        %v2359 = vadd.f32 %v2357, %v2358
        %v2360 = vrot.slane %v2359, 4
        %v2361 = vadd.f32 %v2359, %v2360
        %v2362 = vrot.slane %v2361, 2
        %v2363 = vadd.f32 %v2361, %v2362
        %v2364 = vrot.slane %v2363, 1
        %v2365 = vadd.f32 %v2363, %v2364
        %2366 = vst.msk [vmem:[%s171] sm:$0x1] %vm223, %v2365
        %v2367 = vmul.f32 %v2107, %v2107
        %v2368 = vmul.f32 %v2112, %v2112
        %v2369 = vmul.f32 %v2117, %v2117
        %v2370 = vmul.f32 %v2122, %v2122
        %v2371 = vmul.f32 %v2127, %v2127
        %v2372 = vmul.f32 %v2132, %v2132
        %v2373 = vmul.f32 %v2137, %v2137
        %v2374 = vmul.f32 %v2142, %v2142
        %v2375 = vmul.f32 %v2147, %v2147
        %v2376 = vmul.f32 %v2152, %v2152
        %v2377 = vmul.f32 %v2157, %v2157
        %v2378 = vmul.f32 %v2162, %v2162
        %v2379 = vmul.f32 %v2167, %v2167
        %v2380 = vmul.f32 %v2172, %v2172
        %v2381 = vmul.f32 %v2177, %v2177
        %v2382 = vmul.f32 %v2182, %v2182
        %v2383 = vmul.f32 %v2187, %v2187
        %v2384 = vmul.f32 %v2192, %v2192
        %v2385 = vmul.f32 %v2197, %v2197
        %v2386 = vmul.f32 %v2202, %v2202
        %v2387 = vmul.f32 %v2207, %v2207
        %v2388 = vmul.f32 %v2212, %v2212
        %v2389 = vmul.f32 %v2217, %v2217
        %v2390 = vmul.f32 %v2222, %v2222
        %v2391 = vmul.f32 %v2227, %v2227
        %v2392 = vmul.f32 %v2232, %v2232
        %v2393 = vmul.f32 %v2237, %v2237
        %v2394 = vmul.f32 %v2242, %v2242
        %v2395 = vmul.f32 %v2247, %v2247
        %v2396 = vmul.f32 %v2252, %v2252
        %v2397 = vmul.f32 %v2257, %v2257
        %v2398 = vmul.f32 %v2262, %v2262
        %v2399 = vsel %vm214, %v2367, 0.0
        %v2400 = vsel %vm214, %v2368, 0.0
        %v2401 = vadd.f32 %v2399, %v2400
        %v2402 = vsel %vm214, %v2369, 0.0
        %v2403 = vadd.f32 %v2401, %v2402
        %v2404 = vsel %vm214, %v2370, 0.0
        %v2405 = vadd.f32 %v2403, %v2404
        %v2406 = vsel %vm214, %v2371, 0.0
        %v2407 = vadd.f32 %v2405, %v2406
        %v2408 = vsel %vm214, %v2372, 0.0
        %v2409 = vadd.f32 %v2407, %v2408
        %v2410 = vsel %vm214, %v2373, 0.0
        %v2411 = vadd.f32 %v2409, %v2410
        %v2412 = vsel %vm214, %v2374, 0.0
        %v2413 = vadd.f32 %v2411, %v2412
        %v2414 = vsel %vm214, %v2375, 0.0
        %v2415 = vadd.f32 %v2413, %v2414
        %v2416 = vsel %vm214, %v2376, 0.0
        %v2417 = vadd.f32 %v2415, %v2416
        %v2418 = vsel %vm214, %v2377, 0.0
        %v2419 = vadd.f32 %v2417, %v2418
        %v2420 = vsel %vm214, %v2378, 0.0
        %v2421 = vadd.f32 %v2419, %v2420
        %v2422 = vsel %vm214, %v2379, 0.0
        %v2423 = vadd.f32 %v2421, %v2422
        %v2424 = vsel %vm214, %v2380, 0.0
        %v2425 = vadd.f32 %v2423, %v2424
        %v2426 = vsel %vm214, %v2381, 0.0
        %v2427 = vadd.f32 %v2425, %v2426
        %v2428 = vsel %vm214, %v2382, 0.0
        %v2429 = vadd.f32 %v2427, %v2428
        %v2430 = vsel %vm214, %v2383, 0.0
        %v2431 = vadd.f32 %v2429, %v2430
        %v2432 = vsel %vm214, %v2384, 0.0
        %v2433 = vadd.f32 %v2431, %v2432
        %v2434 = vsel %vm214, %v2385, 0.0
        %v2435 = vadd.f32 %v2433, %v2434
        %v2436 = vsel %vm214, %v2386, 0.0
        %v2437 = vadd.f32 %v2435, %v2436
        %v2438 = vsel %vm214, %v2387, 0.0
        %v2439 = vadd.f32 %v2437, %v2438
        %v2440 = vsel %vm214, %v2388, 0.0
        %v2441 = vadd.f32 %v2439, %v2440
        %v2442 = vsel %vm214, %v2389, 0.0
        %v2443 = vadd.f32 %v2441, %v2442
        %v2444 = vsel %vm214, %v2390, 0.0
        %v2445 = vadd.f32 %v2443, %v2444
        %v2446 = vsel %vm214, %v2391, 0.0
        %v2447 = vadd.f32 %v2445, %v2446
        %v2448 = vsel %vm214, %v2392, 0.0
        %v2449 = vadd.f32 %v2447, %v2448
        %v2450 = vsel %vm214, %v2393, 0.0
        %v2451 = vadd.f32 %v2449, %v2450
        %v2452 = vsel %vm214, %v2394, 0.0
        %v2453 = vadd.f32 %v2451, %v2452
        %v2454 = vsel %vm214, %v2395, 0.0
        %v2455 = vadd.f32 %v2453, %v2454
        %v2456 = vsel %vm214, %v2396, 0.0
        %v2457 = vadd.f32 %v2455, %v2456
        %v2458 = vsel %vm214, %v2397, 0.0
        %v2459 = vadd.f32 %v2457, %v2458
        %v2460 = vsel %vm214, %v2398, 0.0
        %v2461 = vadd.f32 %v2459, %v2460
        %v2462 = vrot.slane %v2461, 4
        %v2463 = vadd.f32 %v2461, %v2462
        %v2464 = vrot.slane %v2463, 2
        %v2465 = vadd.f32 %v2463, %v2464
        %v2466 = vrot.slane %v2465, 1
        %v2467 = vadd.f32 %v2465, %v2466
        %2468 = vst.msk [vmem:[%s171 + $0x1] sm:$0x1] %vm223, %v2467
        %p2469 = scmp.lt.s32.totalorder %s18, 1
        %s2470 = scalar_select %p2469, %s18, 1
        %s2471 = smul.addr %s2470, 32
        %s2472 = smul.addr %s2471, 8
        %s2473 = scalar_lea.vmem %s2, %s2472
        %s2474 = sand.u32 %s99, 1
        %s2475 = scalar_lea.sflag [#allocation5], %s2474
        %s2476 = sand.u32 %s99, 1
        %s2477 = smul.addr %s2476, 2
        %s2478 = scalar_lea.vmem [#allocation4], %s2477
        // Predicated region
        $region29: #{tpu_custom_call.1} parent=27 // pred_check
          %p2479 = pneg %p83
        $region30: #{tpu_custom_call.1} parent=27 // pred_check_branch
          %2481 = sbr.rel (%p2479) target = $region32
        $region31: #{tpu_custom_call.1} parent=27 // pred_region
          _
        $region32: #{tpu_custom_call.1} parent=27 // pred_fallthru
          _
        // Predicated region
        $region33: #{tpu_custom_call.1} parent=27 // pred_check
          %p2482 = pneg %p109
        $region34: #{tpu_custom_call.1} parent=27 // pred_check_branch
          %2484 = sbr.rel (%p2482) target = $region36
        $region35: #{tpu_custom_call.1} parent=27 // pred_region
          %s2486 = ssub.s32 32, 32
          %2487 = vsyncadd %s2475, %s2486
          %s2488 = smul.addr %s18, 32
          %s2489 = scalar_lea.hbm %s3, %s2488
          %s2491 = sshll.u32 %s2478, 4
          %s2492 = int_to_ptr.vmem [resolvable:$true] %s2491
          %2494 = dma.vmem_to_hbm [thread:$0]  %s2492, 32, %s2489, %s2475
        $region36: #{tpu_custom_call.1} parent=27 // pred_fallthru
          _
      $region28: #{tpu_custom_call.1} parent=5 // pred_fallthru
        _
      %p2495 = scmp.le.s32.totalorder 2, %s13
      // Predicated region
      $region37: #{tpu_custom_call.1} parent=5 // pred_check
        %p2496 = pneg %p2495
      $region38: #{tpu_custom_call.1} parent=5 // pred_check_branch
        %2498 = sbr.rel (%p2496) target = $region40
      $region39: #{tpu_custom_call.1} parent=5 // pred_region
        %s2499 = ssub.s32 %s13, 2
        // Predicated region
        $region41: #{tpu_custom_call.1} parent=39 // pred_check
          %p2500 = pneg %p89
        $region42: #{tpu_custom_call.1} parent=39 // pred_check_branch
          %2502 = sbr.rel (%p2500) target = $region44
        $region43: #{tpu_custom_call.1} parent=39 // pred_region
          %p2503 = scmp.lt.s32.totalorder %s19, 1
          %s2504 = scalar_select %p2503, %s19, 1
          %s2505 = smul.addr %s2504, 32
          %s2506 = smul.addr %s2505, 8
          %s2507 = scalar_lea.vmem %s2, %s2506
        $region44: #{tpu_custom_call.1} parent=39 // pred_fallthru
          _
        // Predicated region
        $region45: #{tpu_custom_call.1} parent=39 // pred_check
          %p2508 = pneg %p115
        $region46: #{tpu_custom_call.1} parent=39 // pred_check_branch
          %2510 = sbr.rel (%p2508) target = $region48
        $region47: #{tpu_custom_call.1} parent=39 // pred_region
          %s2511 = sand.u32 %s100, 1
          %s2512 = scalar_lea.sflag [#allocation5], %s2511
          %s2513 = sand.u32 %s100, 1
          %s2514 = smul.addr %s2513, 2
          %s2515 = scalar_lea.vmem [#allocation4], %s2514
          %2516 = dma.done %s2512, 32
        $region48: #{tpu_custom_call.1} parent=39 // pred_fallthru
          _
      $region40: #{tpu_custom_call.1} parent=5 // pred_fallthru
        _
    $region6: #{tpu_custom_call.1} parent=1 // loop_footer
      %s17 = sadd.s32 1, %s13
    $region7: #{tpu_custom_call.1} parent=1 // loop_footer_branch
      %12 = sbr.rel target = $region3
    $region8: #{tpu_custom_call.1} parent=1 // loop_exit
      _
    %2517 = vsyncpa [#allocation5], 1
    %s2518 = scalar_lea.sflag [#allocation5], 1
    %2519 = vsyncpa %s2518, 1

</llo_original>
